<compile_context>
chip_gen: v7x
topology: tpu7x:2x2x1
jax: 0.10.0
libtpu: 0.0.40
codegen_flags: <defaults>
</compile_context>

<pallas_src>
import functools

import jax
import jax.numpy as jnp
from jax.experimental import pallas as pl
from jax.experimental.pallas import tpu as pltpu

# Clamp for the centered per-side exponents: e^{±87} is finite and normal in f32,
# so min(e^{q-k}, e^{k-q}) can never see inf*0.  Exact while activation range <= 174.
_EXP_CLAMP = 87.0


def _diff_attn_kernel(scale, q_ref, qc_ref, kv_ref, kcT_ref, wq_ref, wkk_ref,
                      wkvv_ref, wp_ref, bp_ref, wd_ref, o_ref):
    f32 = jnp.float32
    nt = (((1,), (1,)), ((), ()))            # contract last-dim with last-dim ("A @ B.T")

    q_in = q_ref[0].astype(f32)              # (TQ, E)
    qc = qc_ref[0].astype(f32)               # (TQ, 3)
    kv = kv_ref[0].astype(f32)               # (Nk, I)
    kcT = kcT_ref[0].astype(f32)             # (3, Nk)

    # --- projections in VMEM (no HBM round trip for q_, k, v) -----------------
    qp = jax.lax.dot_general(q_in, wq_ref[...].astype(f32), nt,
                             preferred_element_type=f32)          # (TQ, E)
    kT = jax.lax.dot_general(wkk_ref[...].astype(f32), kv, nt,
                             preferred_element_type=f32)          # (E, Nk)  lanes = Nk
    v = jax.lax.dot_general(kv, wkvv_ref[...].astype(f32), nt,
                            preferred_element_type=f32)           # (Nk, E)

    tq, e = qp.shape
    nk = kT.shape[1]

    # --- feature score: s[i,j] = sum_c exp(-|qp[i,c] - kT[c,j]|) --------------
    # exp(-|a-b|) == min(e^{a-b}, e^{b-a}); a shared centering shift cancels exactly
    # and keeps the per-side exponentials in f32 range.  Clamp each centered side to
    # +-_EXP_CLAMP so no individual factor is inf or 0 (no NaN from inf*0); the min
    # still selects the correct (tiny) branch when the pair distance is huge.
    hi = jnp.maximum(jnp.max(qp), jnp.max(kT))
    lo = jnp.minimum(jnp.min(qp), jnp.min(kT))
    mid = 0.5 * (hi + lo)
    qs = jnp.clip(qp - mid, -_EXP_CLAMP, _EXP_CLAMP)
    ks = jnp.clip(kT - mid, -_EXP_CLAMP, _EXP_CLAMP)
    eq_p = jnp.exp(qs)                       # (TQ, E)   O(TQ*E) exps
    eq_n = jnp.exp(-qs)
    ek_p = jnp.exp(ks)                       # (E, Nk)   O(Nk*E) exps
    ek_n = jnp.exp(-ks)

    s = jnp.zeros((tq, nk), f32)
    for c in range(e):                       # static unroll; lane-dense (TQ, Nk) planes
        a = eq_p[:, c:c + 1] * ek_n[c:c + 1, :]     # e^{q-k}
        b = eq_n[:, c:c + 1] * ek_p[c:c + 1, :]     # e^{k-q}
        s = s + jnp.minimum(a, b)

    # --- positional score: three lane-dense (TQ, Nk) planes -------------------
    # Direct exp here keeps this work on the (otherwise idle) EUP slot instead of
    # adding to the VALU-bound channel loop above.
    for d in range(3):
        s = s + wd_ref[d] * jnp.exp(-jnp.abs(qc[:, d:d + 1] - kcT[d:d + 1, :]))

    # --- softmax over keys (max-subtract; approx reciprocal + 1 Newton step) --
    s = s * scale
    m = jnp.max(s, axis=-1, keepdims=True)
    p = jnp.exp(s - m)
    denom = jnp.sum(p, axis=-1, keepdims=True)
    inv = pl.reciprocal(denom, approx=True)
    inv = inv * (2.0 - denom * inv)          # Newton refinement -> ~f32-exact reciprocal
    attn = p * inv

    # --- attn @ v and output projection (with bias) ---------------------------
    ctx = jnp.dot(attn, v, preferred_element_type=f32)            # (TQ, E)
    out = jax.lax.dot_general(ctx, wp_ref[...].astype(f32), nt,
                              preferred_element_type=f32) + bp_ref[...].astype(f32)
    o_ref[0] = out.astype(o_ref.dtype)


def _pick_tq(nq, nk, e, i, budget_bytes=24 * 1024 * 1024):
    """Largest Nq tile (multiple of 8, dividing Nq) whose per-step VMEM estimate fits."""
    cands = [t for t in (512, 256, 128, 64, 32, 16, 8) if t <= nq and nq % t == 0]
    if not cands:
        cands = [nq]
    for tq in cands:
        est = 4 * (3 * tq * nk               # score / softmax planes
                   + 8 * nk * e              # kT, v, 4 exp tables (+ slack)
                   + 8 * tq * e              # q/qp/exps/ctx + double-buffered in/out
                   + 2 * (nk * i + 3 * nk + 3 * tq)
                   + 2 * e * e + 2 * e * i)
        if est <= budget_bytes:
            return tq
    return cands[-1]


def difference_attention(q, q_coord, kv, kv_coord, params, qk_scale=None):
    wq = params["q_linear_w"]        # (E, E)
    wkv = params["kv_linear_w"]      # (2E, I)
    wd = params["fc_delta_w"]        # (E, 3)
    wp = params["proj_w"]            # (E, E)
    bp = params["proj_b"]            # (E,)

    B, Nq, E = q.shape
    _, Nk, I = kv.shape
    scale = float(qk_scale) if qk_scale is not None else 1.0 / E

    wkv_k = wkv[:E]                                  # (E, I)
    wkv_v = wkv[E:]                                  # (E, I)
    wd_sum = jnp.sum(wd, axis=0)                     # (3,)  exact fold of fc_delta + sum_c
    bp2 = bp.reshape(1, E)
    kv_coord_t = jnp.swapaxes(kv_coord, 1, 2)        # (B, 3, Nk): coord planes lane-dense

    tq = _pick_tq(Nq, Nk, E, I)
    grid = (B, Nq // tq)

    kernel = functools.partial(_diff_attn_kernel, scale)
    out = pl.pallas_call(
        kernel,
        out_shape=jax.ShapeDtypeStruct((B, Nq, E), q.dtype),
        grid=grid,
        in_specs=[
            pl.BlockSpec((1, tq, E), lambda b, t: (b, t, 0)),    # q (raw)
            pl.BlockSpec((1, tq, 3), lambda b, t: (b, t, 0)),    # q_coord
            pl.BlockSpec((1, Nk, I), lambda b, t: (b, 0, 0)),    # kv (raw)
            pl.BlockSpec((1, 3, Nk), lambda b, t: (b, 0, 0)),    # kv_coord^T
            pl.BlockSpec((E, E), lambda b, t: (0, 0)),           # Wq
            pl.BlockSpec((E, I), lambda b, t: (0, 0)),           # Wk
            pl.BlockSpec((E, I), lambda b, t: (0, 0)),           # Wv
            pl.BlockSpec((E, E), lambda b, t: (0, 0)),           # Wproj
            pl.BlockSpec((1, E), lambda b, t: (0, 0)),           # proj bias
            pl.BlockSpec(memory_space=pltpu.MemorySpace.SMEM),   # wd_sum (3 scalars)
        ],
        out_specs=pl.BlockSpec((1, tq, E), lambda b, t: (b, t, 0)),
        compiler_params=pltpu.CompilerParams(
            dimension_semantics=("parallel", "parallel"),
            vmem_limit_bytes=32 * 1024 * 1024),
    )(q, q_coord, kv, kv_coord_t, wq, wkv_k, wkv_v, wp, bp2, wd_sum)
    return out


def reference(q, q_coord, kv, kv_coord, params, qk_scale=None):
    """Pure-JAX transcription of the PyTorch forward (eval mode)."""
    wq, wkv = params["q_linear_w"], params["kv_linear_w"]
    wd, wp, bp = params["fc_delta_w"], params["proj_w"], params["proj_b"]
    C = q.shape[-1]
    scale = qk_scale if qk_scale is not None else 1.0 / C
    q_ = q @ wq.T
    kvp = kv @ wkv.T
    B, Nk, C2 = kvp.shape
    kv_ = kvp.reshape(B, Nk, 2, C2 // 2).transpose(2, 0, 1, 3)
    k, v = kv_[0], kv_[1]
    pos = jnp.exp(-jnp.abs(q_coord[:, :, None] - kv_coord[:, None])) @ wd.T     # (B,Nq,Nk,C)
    attn = jnp.exp(-jnp.abs(q_[:, :, None] - k[:, None])) + pos                 # (B,Nq,Nk,C)
    attn = jax.nn.softmax(attn.sum(-1) * scale, axis=-1)
    qo = attn @ v
    return qo @ wp.T + bp


if __name__ == "__main__":
    B, Nq, Nk = 2, 16, 8
    ico_dim, erp_dim = 8, 32

    key = jax.random.PRNGKey(0)
    ks = jax.random.split(key, 9)
    q = jax.random.normal(ks[0], (B, Nq, erp_dim), jnp.float32)
    q_coord = jax.random.normal(ks[1], (B, Nq, 3), jnp.float32)
    kv = jax.random.normal(ks[2], (B, Nk, ico_dim), jnp.float32)
    kv_coord = jax.random.normal(ks[3], (B, Nk, 3), jnp.float32)

    # deterministic synthetic parameters (shapes from the module's __init__)
    params = {
        "q_linear_w":  jax.random.normal(ks[4], (erp_dim, erp_dim), jnp.float32) * 0.1,
        "kv_linear_w": jax.random.normal(ks[5], (2 * erp_dim, ico_dim), jnp.float32) * 0.1,
        "fc_delta_w":  jax.random.normal(ks[6], (erp_dim, 3), jnp.float32) * 0.1,
        "proj_w":      jax.random.normal(ks[7], (erp_dim, erp_dim), jnp.float32) * 0.1,
        "proj_b":      jax.random.normal(ks[8], (erp_dim,), jnp.float32) * 0.1,
    }

    out = difference_attention(q, q_coord, kv, kv_coord, params)
    out = jax.block_until_ready(out)

    ref = reference(q, q_coord, kv, kv_coord, params)
    assert out.shape == (B, Nq, erp_dim)
    if not jnp.allclose(out, ref, atol=1e-3, rtol=1e-3):
        raise AssertionError("Pallas kernel output does not match reference; max abs diff = "
                             f"{float(jnp.max(jnp.abs(out - ref)))}")
    print("KERNEL_OK")
</pallas_src>

<mosaic_0001>
module attributes {stable_mosaic.version = 11 : i64} {
  func.func @_diff_attn_kernel(%arg0: i32, %arg1: i32, %arg2: memref<1x16x32xf32, #tpu.memory_space<vmem>>, %arg3: memref<1x16x3xf32, #tpu.memory_space<vmem>>, %arg4: memref<1x8x8xf32, #tpu.memory_space<vmem>>, %arg5: memref<1x3x8xf32, #tpu.memory_space<vmem>>, %arg6: memref<32x32xf32, #tpu.memory_space<vmem>>, %arg7: memref<32x8xf32, #tpu.memory_space<vmem>>, %arg8: memref<32x8xf32, #tpu.memory_space<vmem>>, %arg9: memref<32x32xf32, #tpu.memory_space<vmem>>, %arg10: memref<1x32xf32, #tpu.memory_space<vmem>>, %arg11: memref<3xf32, #tpu.memory_space<smem>>, %arg12: memref<1x16x32xf32, #tpu.memory_space<vmem>>) attributes {dimension_semantics = [#tpu.dimension_semantics<parallel>, #tpu.dimension_semantics<parallel>], iteration_bounds = array<i64: 2, 1>, scalar_prefetch = 0 : i64, scratch_operands = 0 : i64, tpu.core_type = #tpu.core_type<tc>, window_params = [{transform_indices = @transform_0, window_bounds = array<i64: 1, 16, 32>}, {transform_indices = @transform_1, window_bounds = array<i64: 1, 16, 3>}, {transform_indices = @transform_2, window_bounds = array<i64: 1, 8, 8>}, {transform_indices = @transform_3, window_bounds = array<i64: 1, 3, 8>}, {pipeline_mode = #tpu.pipeline_mode<synchronous>, transform_indices = @transform_4, window_bounds = array<i64: 32, 32>}, {pipeline_mode = #tpu.pipeline_mode<synchronous>, transform_indices = @transform_5, window_bounds = array<i64: 32, 8>}, {pipeline_mode = #tpu.pipeline_mode<synchronous>, transform_indices = @transform_6, window_bounds = array<i64: 32, 8>}, {pipeline_mode = #tpu.pipeline_mode<synchronous>, transform_indices = @transform_7, window_bounds = array<i64: 32, 32>}, {pipeline_mode = #tpu.pipeline_mode<synchronous>, transform_indices = @transform_8, window_bounds = array<i64: 1, 32>}, {transform_indices = @transform_9, window_bounds = array<i64: 3>}, {transform_indices = @transform_10, window_bounds = array<i64: 1, 16, 32>}]} {
    %c0 = arith.constant 0 : index
    %c0_0 = arith.constant 0 : index
    %c0_1 = arith.constant 0 : index
    %0 = vector.load %arg2[%c0, %c0_0, %c0_1] : memref<1x16x32xf32, #tpu.memory_space<vmem>>, vector<1x16x32xf32>
    %1 = vector.shape_cast %0 : vector<1x16x32xf32> to vector<16x32xf32>
    %c0_2 = arith.constant 0 : index
    %c0_3 = arith.constant 0 : index
    %c0_4 = arith.constant 0 : index
    %2 = vector.load %arg3[%c0_2, %c0_3, %c0_4] : memref<1x16x3xf32, #tpu.memory_space<vmem>>, vector<1x16x3xf32>
    %3 = vector.shape_cast %2 : vector<1x16x3xf32> to vector<16x3xf32>
    %c0_5 = arith.constant 0 : index
    %c0_6 = arith.constant 0 : index
    %c0_7 = arith.constant 0 : index
    %4 = vector.load %arg4[%c0_5, %c0_6, %c0_7] : memref<1x8x8xf32, #tpu.memory_space<vmem>>, vector<1x8x8xf32>
    %5 = vector.shape_cast %4 : vector<1x8x8xf32> to vector<8x8xf32>
    %c0_8 = arith.constant 0 : index
    %c0_9 = arith.constant 0 : index
    %c0_10 = arith.constant 0 : index
    %6 = vector.load %arg5[%c0_8, %c0_9, %c0_10] : memref<1x3x8xf32, #tpu.memory_space<vmem>>, vector<1x3x8xf32>
    %7 = vector.shape_cast %6 : vector<1x3x8xf32> to vector<3x8xf32>
    %c0_11 = arith.constant 0 : index
    %c0_12 = arith.constant 0 : index
    %8 = vector.load %arg6[%c0_11, %c0_12] : memref<32x32xf32, #tpu.memory_space<vmem>>, vector<32x32xf32>
    %cst = arith.constant dense<0.000000e+00> : vector<16x32xf32>
    %9 = tpu.matmul %1, %8, %cst {dimension_numbers = #tpu.dot_dimension_numbers<[1], [1], [0], [0], [0, 0, 1, 0], [], []>} : vector<16x32xf32>, vector<32x32xf32>, vector<16x32xf32> -> vector<16x32xf32>
    %c0_13 = arith.constant 0 : index
    %c0_14 = arith.constant 0 : index
    %10 = vector.load %arg7[%c0_13, %c0_14] : memref<32x8xf32, #tpu.memory_space<vmem>>, vector<32x8xf32>
    %cst_15 = arith.constant dense<0.000000e+00> : vector<32x8xf32>
    %11 = tpu.matmul %10, %5, %cst_15 {dimension_numbers = #tpu.dot_dimension_numbers<[1], [1], [0], [0], [0, 0, 1, 0], [], []>} : vector<32x8xf32>, vector<8x8xf32>, vector<32x8xf32> -> vector<32x8xf32>
    %c0_16 = arith.constant 0 : index
    %c0_17 = arith.constant 0 : index
    %12 = vector.load %arg8[%c0_16, %c0_17] : memref<32x8xf32, #tpu.memory_space<vmem>>, vector<32x8xf32>
    %cst_18 = arith.constant dense<0.000000e+00> : vector<8x32xf32>
    %13 = tpu.matmul %5, %12, %cst_18 {dimension_numbers = #tpu.dot_dimension_numbers<[1], [1], [0], [0], [0, 0, 1, 0], [], []>} : vector<8x8xf32>, vector<32x8xf32>, vector<8x32xf32> -> vector<8x32xf32>
    %14 = vector.shape_cast %9 : vector<16x32xf32> to vector<1x16x32xf32>
    %cst_19 = arith.constant dense<0xFF800000> : vector<1xf32>
    %15 = vector.multi_reduction <maximumf>, %14, %cst_19 [1, 2] : vector<1x16x32xf32> to vector<1xf32>
    %16 = vector.shape_cast %15 : vector<1xf32> to vector<1x1x1xf32>
    %17 = vector.extract %16[0, 0, 0] : f32 from vector<1x1x1xf32>
    %18 = vector.shape_cast %11 : vector<32x8xf32> to vector<1x32x8xf32>
    %cst_20 = arith.constant dense<0xFF800000> : vector<1xf32>
    %19 = vector.multi_reduction <maximumf>, %18, %cst_20 [1, 2] : vector<1x32x8xf32> to vector<1xf32>
    %20 = vector.shape_cast %19 : vector<1xf32> to vector<1x1x1xf32>
    %21 = vector.extract %20[0, 0, 0] : f32 from vector<1x1x1xf32>
    %22 = arith.maximumf %17, %21 : f32
    %23 = vector.shape_cast %9 : vector<16x32xf32> to vector<1x16x32xf32>
    %cst_21 = arith.constant dense<0x7F800000> : vector<1xf32>
    %24 = vector.multi_reduction <minimumf>, %23, %cst_21 [1, 2] : vector<1x16x32xf32> to vector<1xf32>
    %25 = vector.shape_cast %24 : vector<1xf32> to vector<1x1x1xf32>
    %26 = vector.extract %25[0, 0, 0] : f32 from vector<1x1x1xf32>
    %27 = vector.shape_cast %11 : vector<32x8xf32> to vector<1x32x8xf32>
    %cst_22 = arith.constant dense<0x7F800000> : vector<1xf32>
    %28 = vector.multi_reduction <minimumf>, %27, %cst_22 [1, 2] : vector<1x32x8xf32> to vector<1xf32>
    %29 = vector.shape_cast %28 : vector<1xf32> to vector<1x1x1xf32>
    %30 = vector.extract %29[0, 0, 0] : f32 from vector<1x1x1xf32>
    %31 = arith.minimumf %26, %30 : f32
    %32 = arith.addf %22, %31 : f32
    %cst_23 = arith.constant 5.000000e-01 : f32
    %33 = arith.mulf %cst_23, %32 : f32
    %34 = vector.broadcast %33 : f32 to vector<16x32xf32>
    %35 = arith.subf %9, %34 : vector<16x32xf32>
    %cst_24 = arith.constant -8.700000e+01 : f32
    %cst_25 = arith.constant 8.700000e+01 : f32
    %36 = vector.broadcast %cst_24 : f32 to vector<16x32xf32>
    %37 = arith.maximumf %36, %35 : vector<16x32xf32>
    %38 = vector.broadcast %cst_25 : f32 to vector<16x32xf32>
    %39 = arith.minimumf %38, %37 : vector<16x32xf32>
    %40 = vector.broadcast %33 : f32 to vector<32x8xf32>
    %41 = arith.subf %11, %40 : vector<32x8xf32>
    %cst_26 = arith.constant -8.700000e+01 : f32
    %cst_27 = arith.constant 8.700000e+01 : f32
    %42 = vector.broadcast %cst_26 : f32 to vector<32x8xf32>
    %43 = arith.maximumf %42, %41 : vector<32x8xf32>
    %44 = vector.broadcast %cst_27 : f32 to vector<32x8xf32>
    %45 = arith.minimumf %44, %43 : vector<32x8xf32>
    %46 = math.exp %39 : vector<16x32xf32>
    %cst_28 = arith.constant 0.000000e+00 : f32
    %47 = vector.broadcast %cst_28 : f32 to vector<16x32xf32>
    %48 = arith.subf %47, %39 : vector<16x32xf32>
    %49 = math.exp %48 : vector<16x32xf32>
    %50 = math.exp %45 : vector<32x8xf32>
    %cst_29 = arith.constant 0.000000e+00 : f32
    %51 = vector.broadcast %cst_29 : f32 to vector<32x8xf32>
    %52 = arith.subf %51, %45 : vector<32x8xf32>
    %53 = math.exp %52 : vector<32x8xf32>
    %cst_30 = arith.constant 0.000000e+00 : f32
    %54 = vector.broadcast %cst_30 : f32 to vector<16x8xf32>
    %55 = vector.extract_strided_slice %46 {offsets = [0, 0], sizes = [16, 1], strides = [1, 1]} : vector<16x32xf32> to vector<16x1xf32>
    %56 = vector.extract_strided_slice %53 {offsets = [0, 0], sizes = [1, 8], strides = [1, 1]} : vector<32x8xf32> to vector<1x8xf32>
    %57 = vector.broadcast %55 : vector<16x1xf32> to vector<16x8xf32>
    %58 = vector.broadcast %56 : vector<1x8xf32> to vector<16x8xf32>
    %59 = arith.mulf %57, %58 : vector<16x8xf32>
    %60 = vector.extract_strided_slice %49 {offsets = [0, 0], sizes = [16, 1], strides = [1, 1]} : vector<16x32xf32> to vector<16x1xf32>
    %61 = vector.extract_strided_slice %50 {offsets = [0, 0], sizes = [1, 8], strides = [1, 1]} : vector<32x8xf32> to vector<1x8xf32>
    %62 = vector.broadcast %60 : vector<16x1xf32> to vector<16x8xf32>
    %63 = vector.broadcast %61 : vector<1x8xf32> to vector<16x8xf32>
    %64 = arith.mulf %62, %63 : vector<16x8xf32>
    %65 = arith.minimumf %59, %64 : vector<16x8xf32>
    %66 = arith.addf %54, %65 : vector<16x8xf32>
    %67 = vector.extract_strided_slice %46 {offsets = [0, 1], sizes = [16, 1], strides = [1, 1]} : vector<16x32xf32> to vector<16x1xf32>
    %68 = vector.extract_strided_slice %53 {offsets = [1, 0], sizes = [1, 8], strides = [1, 1]} : vector<32x8xf32> to vector<1x8xf32>
    %69 = vector.broadcast %67 : vector<16x1xf32> to vector<16x8xf32>
    %70 = vector.broadcast %68 : vector<1x8xf32> to vector<16x8xf32>
    %71 = arith.mulf %69, %70 : vector<16x8xf32>
    %72 = vector.extract_strided_slice %49 {offsets = [0, 1], sizes = [16, 1], strides = [1, 1]} : vector<16x32xf32> to vector<16x1xf32>
    %73 = vector.extract_strided_slice %50 {offsets = [1, 0], sizes = [1, 8], strides = [1, 1]} : vector<32x8xf32> to vector<1x8xf32>
    %74 = vector.broadcast %72 : vector<16x1xf32> to vector<16x8xf32>
    %75 = vector.broadcast %73 : vector<1x8xf32> to vector<16x8xf32>
    %76 = arith.mulf %74, %75 : vector<16x8xf32>
    %77 = arith.minimumf %71, %76 : vector<16x8xf32>
    %78 = arith.addf %66, %77 : vector<16x8xf32>
    %79 = vector.extract_strided_slice %46 {offsets = [0, 2], sizes = [16, 1], strides = [1, 1]} : vector<16x32xf32> to vector<16x1xf32>
    %80 = vector.extract_strided_slice %53 {offsets = [2, 0], sizes = [1, 8], strides = [1, 1]} : vector<32x8xf32> to vector<1x8xf32>
    %81 = vector.broadcast %79 : vector<16x1xf32> to vector<16x8xf32>
    %82 = vector.broadcast %80 : vector<1x8xf32> to vector<16x8xf32>
    %83 = arith.mulf %81, %82 : vector<16x8xf32>
    %84 = vector.extract_strided_slice %49 {offsets = [0, 2], sizes = [16, 1], strides = [1, 1]} : vector<16x32xf32> to vector<16x1xf32>
    %85 = vector.extract_strided_slice %50 {offsets = [2, 0], sizes = [1, 8], strides = [1, 1]} : vector<32x8xf32> to vector<1x8xf32>
    %86 = vector.broadcast %84 : vector<16x1xf32> to vector<16x8xf32>
    %87 = vector.broadcast %85 : vector<1x8xf32> to vector<16x8xf32>
    %88 = arith.mulf %86, %87 : vector<16x8xf32>
    %89 = arith.minimumf %83, %88 : vector<16x8xf32>
    %90 = arith.addf %78, %89 : vector<16x8xf32>
    %91 = vector.extract_strided_slice %46 {offsets = [0, 3], sizes = [16, 1], strides = [1, 1]} : vector<16x32xf32> to vector<16x1xf32>
    %92 = vector.extract_strided_slice %53 {offsets = [3, 0], sizes = [1, 8], strides = [1, 1]} : vector<32x8xf32> to vector<1x8xf32>
    %93 = vector.broadcast %91 : vector<16x1xf32> to vector<16x8xf32>
    %94 = vector.broadcast %92 : vector<1x8xf32> to vector<16x8xf32>
    %95 = arith.mulf %93, %94 : vector<16x8xf32>
    %96 = vector.extract_strided_slice %49 {offsets = [0, 3], sizes = [16, 1], strides = [1, 1]} : vector<16x32xf32> to vector<16x1xf32>
    %97 = vector.extract_strided_slice %50 {offsets = [3, 0], sizes = [1, 8], strides = [1, 1]} : vector<32x8xf32> to vector<1x8xf32>
    %98 = vector.broadcast %96 : vector<16x1xf32> to vector<16x8xf32>
    %99 = vector.broadcast %97 : vector<1x8xf32> to vector<16x8xf32>
    %100 = arith.mulf %98, %99 : vector<16x8xf32>
    %101 = arith.minimumf %95, %100 : vector<16x8xf32>
    %102 = arith.addf %90, %101 : vector<16x8xf32>
    %103 = vector.extract_strided_slice %46 {offsets = [0, 4], sizes = [16, 1], strides = [1, 1]} : vector<16x32xf32> to vector<16x1xf32>
    %104 = vector.extract_strided_slice %53 {offsets = [4, 0], sizes = [1, 8], strides = [1, 1]} : vector<32x8xf32> to vector<1x8xf32>
    %105 = vector.broadcast %103 : vector<16x1xf32> to vector<16x8xf32>
    %106 = vector.broadcast %104 : vector<1x8xf32> to vector<16x8xf32>
    %107 = arith.mulf %105, %106 : vector<16x8xf32>
    %108 = vector.extract_strided_slice %49 {offsets = [0, 4], sizes = [16, 1], strides = [1, 1]} : vector<16x32xf32> to vector<16x1xf32>
    %109 = vector.extract_strided_slice %50 {offsets = [4, 0], sizes = [1, 8], strides = [1, 1]} : vector<32x8xf32> to vector<1x8xf32>
    %110 = vector.broadcast %108 : vector<16x1xf32> to vector<16x8xf32>
    %111 = vector.broadcast %109 : vector<1x8xf32> to vector<16x8xf32>
    %112 = arith.mulf %110, %111 : vector<16x8xf32>
    %113 = arith.minimumf %107, %112 : vector<16x8xf32>
    %114 = arith.addf %102, %113 : vector<16x8xf32>
    %115 = vector.extract_strided_slice %46 {offsets = [0, 5], sizes = [16, 1], strides = [1, 1]} : vector<16x32xf32> to vector<16x1xf32>
    %116 = vector.extract_strided_slice %53 {offsets = [5, 0], sizes = [1, 8], strides = [1, 1]} : vector<32x8xf32> to vector<1x8xf32>
    %117 = vector.broadcast %115 : vector<16x1xf32> to vector<16x8xf32>
    %118 = vector.broadcast %116 : vector<1x8xf32> to vector<16x8xf32>
    %119 = arith.mulf %117, %118 : vector<16x8xf32>
    %120 = vector.extract_strided_slice %49 {offsets = [0, 5], sizes = [16, 1], strides = [1, 1]} : vector<16x32xf32> to vector<16x1xf32>
    %121 = vector.extract_strided_slice %50 {offsets = [5, 0], sizes = [1, 8], strides = [1, 1]} : vector<32x8xf32> to vector<1x8xf32>
    %122 = vector.broadcast %120 : vector<16x1xf32> to vector<16x8xf32>
    %123 = vector.broadcast %121 : vector<1x8xf32> to vector<16x8xf32>
    %124 = arith.mulf %122, %123 : vector<16x8xf32>
    %125 = arith.minimumf %119, %124 : vector<16x8xf32>
    %126 = arith.addf %114, %125 : vector<16x8xf32>
    %127 = vector.extract_strided_slice %46 {offsets = [0, 6], sizes = [16, 1], strides = [1, 1]} : vector<16x32xf32> to vector<16x1xf32>
    %128 = vector.extract_strided_slice %53 {offsets = [6, 0], sizes = [1, 8], strides = [1, 1]} : vector<32x8xf32> to vector<1x8xf32>
    %129 = vector.broadcast %127 : vector<16x1xf32> to vector<16x8xf32>
    %130 = vector.broadcast %128 : vector<1x8xf32> to vector<16x8xf32>
    %131 = arith.mulf %129, %130 : vector<16x8xf32>
    %132 = vector.extract_strided_slice %49 {offsets = [0, 6], sizes = [16, 1], strides = [1, 1]} : vector<16x32xf32> to vector<16x1xf32>
    %133 = vector.extract_strided_slice %50 {offsets = [6, 0], sizes = [1, 8], strides = [1, 1]} : vector<32x8xf32> to vector<1x8xf32>
    %134 = vector.broadcast %132 : vector<16x1xf32> to vector<16x8xf32>
    %135 = vector.broadcast %133 : vector<1x8xf32> to vector<16x8xf32>
    %136 = arith.mulf %134, %135 : vector<16x8xf32>
    %137 = arith.minimumf %131, %136 : vector<16x8xf32>
    %138 = arith.addf %126, %137 : vector<16x8xf32>
    %139 = vector.extract_strided_slice %46 {offsets = [0, 7], sizes = [16, 1], strides = [1, 1]} : vector<16x32xf32> to vector<16x1xf32>
    %140 = vector.extract_strided_slice %53 {offsets = [7, 0], sizes = [1, 8], strides = [1, 1]} : vector<32x8xf32> to vector<1x8xf32>
    %141 = vector.broadcast %139 : vector<16x1xf32> to vector<16x8xf32>
    %142 = vector.broadcast %140 : vector<1x8xf32> to vector<16x8xf32>
    %143 = arith.mulf %141, %142 : vector<16x8xf32>
    %144 = vector.extract_strided_slice %49 {offsets = [0, 7], sizes = [16, 1], strides = [1, 1]} : vector<16x32xf32> to vector<16x1xf32>
    %145 = vector.extract_strided_slice %50 {offsets = [7, 0], sizes = [1, 8], strides = [1, 1]} : vector<32x8xf32> to vector<1x8xf32>
    %146 = vector.broadcast %144 : vector<16x1xf32> to vector<16x8xf32>
    %147 = vector.broadcast %145 : vector<1x8xf32> to vector<16x8xf32>
    %148 = arith.mulf %146, %147 : vector<16x8xf32>
    %149 = arith.minimumf %143, %148 : vector<16x8xf32>
    %150 = arith.addf %138, %149 : vector<16x8xf32>
    %151 = vector.extract_strided_slice %46 {offsets = [0, 8], sizes = [16, 1], strides = [1, 1]} : vector<16x32xf32> to vector<16x1xf32>
    %152 = vector.extract_strided_slice %53 {offsets = [8, 0], sizes = [1, 8], strides = [1, 1]} : vector<32x8xf32> to vector<1x8xf32>
    %153 = vector.broadcast %151 : vector<16x1xf32> to vector<16x8xf32>
    %154 = vector.broadcast %152 : vector<1x8xf32> to vector<16x8xf32>
    %155 = arith.mulf %153, %154 : vector<16x8xf32>
    %156 = vector.extract_strided_slice %49 {offsets = [0, 8], sizes = [16, 1], strides = [1, 1]} : vector<16x32xf32> to vector<16x1xf32>
    %157 = vector.extract_strided_slice %50 {offsets = [8, 0], sizes = [1, 8], strides = [1, 1]} : vector<32x8xf32> to vector<1x8xf32>
    %158 = vector.broadcast %156 : vector<16x1xf32> to vector<16x8xf32>
    %159 = vector.broadcast %157 : vector<1x8xf32> to vector<16x8xf32>
    %160 = arith.mulf %158, %159 : vector<16x8xf32>
    %161 = arith.minimumf %155, %160 : vector<16x8xf32>
    %162 = arith.addf %150, %161 : vector<16x8xf32>
    %163 = vector.extract_strided_slice %46 {offsets = [0, 9], sizes = [16, 1], strides = [1, 1]} : vector<16x32xf32> to vector<16x1xf32>
    %164 = vector.extract_strided_slice %53 {offsets = [9, 0], sizes = [1, 8], strides = [1, 1]} : vector<32x8xf32> to vector<1x8xf32>
    %165 = vector.broadcast %163 : vector<16x1xf32> to vector<16x8xf32>
    %166 = vector.broadcast %164 : vector<1x8xf32> to vector<16x8xf32>
    %167 = arith.mulf %165, %166 : vector<16x8xf32>
    %168 = vector.extract_strided_slice %49 {offsets = [0, 9], sizes = [16, 1], strides = [1, 1]} : vector<16x32xf32> to vector<16x1xf32>
    %169 = vector.extract_strided_slice %50 {offsets = [9, 0], sizes = [1, 8], strides = [1, 1]} : vector<32x8xf32> to vector<1x8xf32>
    %170 = vector.broadcast %168 : vector<16x1xf32> to vector<16x8xf32>
    %171 = vector.broadcast %169 : vector<1x8xf32> to vector<16x8xf32>
    %172 = arith.mulf %170, %171 : vector<16x8xf32>
    %173 = arith.minimumf %167, %172 : vector<16x8xf32>
    %174 = arith.addf %162, %173 : vector<16x8xf32>
    %175 = vector.extract_strided_slice %46 {offsets = [0, 10], sizes = [16, 1], strides = [1, 1]} : vector<16x32xf32> to vector<16x1xf32>
    %176 = vector.extract_strided_slice %53 {offsets = [10, 0], sizes = [1, 8], strides = [1, 1]} : vector<32x8xf32> to vector<1x8xf32>
    %177 = vector.broadcast %175 : vector<16x1xf32> to vector<16x8xf32>
    %178 = vector.broadcast %176 : vector<1x8xf32> to vector<16x8xf32>
    %179 = arith.mulf %177, %178 : vector<16x8xf32>
    %180 = vector.extract_strided_slice %49 {offsets = [0, 10], sizes = [16, 1], strides = [1, 1]} : vector<16x32xf32> to vector<16x1xf32>
    %181 = vector.extract_strided_slice %50 {offsets = [10, 0], sizes = [1, 8], strides = [1, 1]} : vector<32x8xf32> to vector<1x8xf32>
    %182 = vector.broadcast %180 : vector<16x1xf32> to vector<16x8xf32>
    %183 = vector.broadcast %181 : vector<1x8xf32> to vector<16x8xf32>
    %184 = arith.mulf %182, %183 : vector<16x8xf32>
    %185 = arith.minimumf %179, %184 : vector<16x8xf32>
    %186 = arith.addf %174, %185 : vector<16x8xf32>
    %187 = vector.extract_strided_slice %46 {offsets = [0, 11], sizes = [16, 1], strides = [1, 1]} : vector<16x32xf32> to vector<16x1xf32>
    %188 = vector.extract_strided_slice %53 {offsets = [11, 0], sizes = [1, 8], strides = [1, 1]} : vector<32x8xf32> to vector<1x8xf32>
    %189 = vector.broadcast %187 : vector<16x1xf32> to vector<16x8xf32>
    %190 = vector.broadcast %188 : vector<1x8xf32> to vector<16x8xf32>
    %191 = arith.mulf %189, %190 : vector<16x8xf32>
    %192 = vector.extract_strided_slice %49 {offsets = [0, 11], sizes = [16, 1], strides = [1, 1]} : vector<16x32xf32> to vector<16x1xf32>
    %193 = vector.extract_strided_slice %50 {offsets = [11, 0], sizes = [1, 8], strides = [1, 1]} : vector<32x8xf32> to vector<1x8xf32>
    %194 = vector.broadcast %192 : vector<16x1xf32> to vector<16x8xf32>
    %195 = vector.broadcast %193 : vector<1x8xf32> to vector<16x8xf32>
    %196 = arith.mulf %194, %195 : vector<16x8xf32>
    %197 = arith.minimumf %191, %196 : vector<16x8xf32>
    %198 = arith.addf %186, %197 : vector<16x8xf32>
    %199 = vector.extract_strided_slice %46 {offsets = [0, 12], sizes = [16, 1], strides = [1, 1]} : vector<16x32xf32> to vector<16x1xf32>
    %200 = vector.extract_strided_slice %53 {offsets = [12, 0], sizes = [1, 8], strides = [1, 1]} : vector<32x8xf32> to vector<1x8xf32>
    %201 = vector.broadcast %199 : vector<16x1xf32> to vector<16x8xf32>
    %202 = vector.broadcast %200 : vector<1x8xf32> to vector<16x8xf32>
    %203 = arith.mulf %201, %202 : vector<16x8xf32>
    %204 = vector.extract_strided_slice %49 {offsets = [0, 12], sizes = [16, 1], strides = [1, 1]} : vector<16x32xf32> to vector<16x1xf32>
    %205 = vector.extract_strided_slice %50 {offsets = [12, 0], sizes = [1, 8], strides = [1, 1]} : vector<32x8xf32> to vector<1x8xf32>
    %206 = vector.broadcast %204 : vector<16x1xf32> to vector<16x8xf32>
    %207 = vector.broadcast %205 : vector<1x8xf32> to vector<16x8xf32>
    %208 = arith.mulf %206, %207 : vector<16x8xf32>
    %209 = arith.minimumf %203, %208 : vector<16x8xf32>
    %210 = arith.addf %198, %209 : vector<16x8xf32>
    %211 = vector.extract_strided_slice %46 {offsets = [0, 13], sizes = [16, 1], strides = [1, 1]} : vector<16x32xf32> to vector<16x1xf32>
    %212 = vector.extract_strided_slice %53 {offsets = [13, 0], sizes = [1, 8], strides = [1, 1]} : vector<32x8xf32> to vector<1x8xf32>
    %213 = vector.broadcast %211 : vector<16x1xf32> to vector<16x8xf32>
    %214 = vector.broadcast %212 : vector<1x8xf32> to vector<16x8xf32>
    %215 = arith.mulf %213, %214 : vector<16x8xf32>
    %216 = vector.extract_strided_slice %49 {offsets = [0, 13], sizes = [16, 1], strides = [1, 1]} : vector<16x32xf32> to vector<16x1xf32>
    %217 = vector.extract_strided_slice %50 {offsets = [13, 0], sizes = [1, 8], strides = [1, 1]} : vector<32x8xf32> to vector<1x8xf32>
    %218 = vector.broadcast %216 : vector<16x1xf32> to vector<16x8xf32>
    %219 = vector.broadcast %217 : vector<1x8xf32> to vector<16x8xf32>
    %220 = arith.mulf %218, %219 : vector<16x8xf32>
    %221 = arith.minimumf %215, %220 : vector<16x8xf32>
    %222 = arith.addf %210, %221 : vector<16x8xf32>
    %223 = vector.extract_strided_slice %46 {offsets = [0, 14], sizes = [16, 1], strides = [1, 1]} : vector<16x32xf32> to vector<16x1xf32>
    %224 = vector.extract_strided_slice %53 {offsets = [14, 0], sizes = [1, 8], strides = [1, 1]} : vector<32x8xf32> to vector<1x8xf32>
    %225 = vector.broadcast %223 : vector<16x1xf32> to vector<16x8xf32>
    %226 = vector.broadcast %224 : vector<1x8xf32> to vector<16x8xf32>
    %227 = arith.mulf %225, %226 : vector<16x8xf32>
    %228 = vector.extract_strided_slice %49 {offsets = [0, 14], sizes = [16, 1], strides = [1, 1]} : vector<16x32xf32> to vector<16x1xf32>
    %229 = vector.extract_strided_slice %50 {offsets = [14, 0], sizes = [1, 8], strides = [1, 1]} : vector<32x8xf32> to vector<1x8xf32>
    %230 = vector.broadcast %228 : vector<16x1xf32> to vector<16x8xf32>
    %231 = vector.broadcast %229 : vector<1x8xf32> to vector<16x8xf32>
    %232 = arith.mulf %230, %231 : vector<16x8xf32>
    %233 = arith.minimumf %227, %232 : vector<16x8xf32>
    %234 = arith.addf %222, %233 : vector<16x8xf32>
    %235 = vector.extract_strided_slice %46 {offsets = [0, 15], sizes = [16, 1], strides = [1, 1]} : vector<16x32xf32> to vector<16x1xf32>
    %236 = vector.extract_strided_slice %53 {offsets = [15, 0], sizes = [1, 8], strides = [1, 1]} : vector<32x8xf32> to vector<1x8xf32>
    %237 = vector.broadcast %235 : vector<16x1xf32> to vector<16x8xf32>
    %238 = vector.broadcast %236 : vector<1x8xf32> to vector<16x8xf32>
    %239 = arith.mulf %237, %238 : vector<16x8xf32>
    %240 = vector.extract_strided_slice %49 {offsets = [0, 15], sizes = [16, 1], strides = [1, 1]} : vector<16x32xf32> to vector<16x1xf32>
    %241 = vector.extract_strided_slice %50 {offsets = [15, 0], sizes = [1, 8], strides = [1, 1]} : vector<32x8xf32> to vector<1x8xf32>
    %242 = vector.broadcast %240 : vector<16x1xf32> to vector<16x8xf32>
    %243 = vector.broadcast %241 : vector<1x8xf32> to vector<16x8xf32>
    %244 = arith.mulf %242, %243 : vector<16x8xf32>
    %245 = arith.minimumf %239, %244 : vector<16x8xf32>
    %246 = arith.addf %234, %245 : vector<16x8xf32>
    %247 = vector.extract_strided_slice %46 {offsets = [0, 16], sizes = [16, 1], strides = [1, 1]} : vector<16x32xf32> to vector<16x1xf32>
    %248 = vector.extract_strided_slice %53 {offsets = [16, 0], sizes = [1, 8], strides = [1, 1]} : vector<32x8xf32> to vector<1x8xf32>
    %249 = vector.broadcast %247 : vector<16x1xf32> to vector<16x8xf32>
    %250 = vector.broadcast %248 : vector<1x8xf32> to vector<16x8xf32>
    %251 = arith.mulf %249, %250 : vector<16x8xf32>
    %252 = vector.extract_strided_slice %49 {offsets = [0, 16], sizes = [16, 1], strides = [1, 1]} : vector<16x32xf32> to vector<16x1xf32>
    %253 = vector.extract_strided_slice %50 {offsets = [16, 0], sizes = [1, 8], strides = [1, 1]} : vector<32x8xf32> to vector<1x8xf32>
    %254 = vector.broadcast %252 : vector<16x1xf32> to vector<16x8xf32>
    %255 = vector.broadcast %253 : vector<1x8xf32> to vector<16x8xf32>
    %256 = arith.mulf %254, %255 : vector<16x8xf32>
    %257 = arith.minimumf %251, %256 : vector<16x8xf32>
    %258 = arith.addf %246, %257 : vector<16x8xf32>
    %259 = vector.extract_strided_slice %46 {offsets = [0, 17], sizes = [16, 1], strides = [1, 1]} : vector<16x32xf32> to vector<16x1xf32>
    %260 = vector.extract_strided_slice %53 {offsets = [17, 0], sizes = [1, 8], strides = [1, 1]} : vector<32x8xf32> to vector<1x8xf32>
    %261 = vector.broadcast %259 : vector<16x1xf32> to vector<16x8xf32>
    %262 = vector.broadcast %260 : vector<1x8xf32> to vector<16x8xf32>
    %263 = arith.mulf %261, %262 : vector<16x8xf32>
    %264 = vector.extract_strided_slice %49 {offsets = [0, 17], sizes = [16, 1], strides = [1, 1]} : vector<16x32xf32> to vector<16x1xf32>
    %265 = vector.extract_strided_slice %50 {offsets = [17, 0], sizes = [1, 8], strides = [1, 1]} : vector<32x8xf32> to vector<1x8xf32>
    %266 = vector.broadcast %264 : vector<16x1xf32> to vector<16x8xf32>
    %267 = vector.broadcast %265 : vector<1x8xf32> to vector<16x8xf32>
    %268 = arith.mulf %266, %267 : vector<16x8xf32>
    %269 = arith.minimumf %263, %268 : vector<16x8xf32>
    %270 = arith.addf %258, %269 : vector<16x8xf32>
    %271 = vector.extract_strided_slice %46 {offsets = [0, 18], sizes = [16, 1], strides = [1, 1]} : vector<16x32xf32> to vector<16x1xf32>
    %272 = vector.extract_strided_slice %53 {offsets = [18, 0], sizes = [1, 8], strides = [1, 1]} : vector<32x8xf32> to vector<1x8xf32>
    %273 = vector.broadcast %271 : vector<16x1xf32> to vector<16x8xf32>
    %274 = vector.broadcast %272 : vector<1x8xf32> to vector<16x8xf32>
    %275 = arith.mulf %273, %274 : vector<16x8xf32>
    %276 = vector.extract_strided_slice %49 {offsets = [0, 18], sizes = [16, 1], strides = [1, 1]} : vector<16x32xf32> to vector<16x1xf32>
    %277 = vector.extract_strided_slice %50 {offsets = [18, 0], sizes = [1, 8], strides = [1, 1]} : vector<32x8xf32> to vector<1x8xf32>
    %278 = vector.broadcast %276 : vector<16x1xf32> to vector<16x8xf32>
    %279 = vector.broadcast %277 : vector<1x8xf32> to vector<16x8xf32>
    %280 = arith.mulf %278, %279 : vector<16x8xf32>
    %281 = arith.minimumf %275, %280 : vector<16x8xf32>
    %282 = arith.addf %270, %281 : vector<16x8xf32>
    %283 = vector.extract_strided_slice %46 {offsets = [0, 19], sizes = [16, 1], strides = [1, 1]} : vector<16x32xf32> to vector<16x1xf32>
    %284 = vector.extract_strided_slice %53 {offsets = [19, 0], sizes = [1, 8], strides = [1, 1]} : vector<32x8xf32> to vector<1x8xf32>
    %285 = vector.broadcast %283 : vector<16x1xf32> to vector<16x8xf32>
    %286 = vector.broadcast %284 : vector<1x8xf32> to vector<16x8xf32>
    %287 = arith.mulf %285, %286 : vector<16x8xf32>
    %288 = vector.extract_strided_slice %49 {offsets = [0, 19], sizes = [16, 1], strides = [1, 1]} : vector<16x32xf32> to vector<16x1xf32>
    %289 = vector.extract_strided_slice %50 {offsets = [19, 0], sizes = [1, 8], strides = [1, 1]} : vector<32x8xf32> to vector<1x8xf32>
    %290 = vector.broadcast %288 : vector<16x1xf32> to vector<16x8xf32>
    %291 = vector.broadcast %289 : vector<1x8xf32> to vector<16x8xf32>
    %292 = arith.mulf %290, %291 : vector<16x8xf32>
    %293 = arith.minimumf %287, %292 : vector<16x8xf32>
    %294 = arith.addf %282, %293 : vector<16x8xf32>
    %295 = vector.extract_strided_slice %46 {offsets = [0, 20], sizes = [16, 1], strides = [1, 1]} : vector<16x32xf32> to vector<16x1xf32>
    %296 = vector.extract_strided_slice %53 {offsets = [20, 0], sizes = [1, 8], strides = [1, 1]} : vector<32x8xf32> to vector<1x8xf32>
    %297 = vector.broadcast %295 : vector<16x1xf32> to vector<16x8xf32>
    %298 = vector.broadcast %296 : vector<1x8xf32> to vector<16x8xf32>
    %299 = arith.mulf %297, %298 : vector<16x8xf32>
    %300 = vector.extract_strided_slice %49 {offsets = [0, 20], sizes = [16, 1], strides = [1, 1]} : vector<16x32xf32> to vector<16x1xf32>
    %301 = vector.extract_strided_slice %50 {offsets = [20, 0], sizes = [1, 8], strides = [1, 1]} : vector<32x8xf32> to vector<1x8xf32>
    %302 = vector.broadcast %300 : vector<16x1xf32> to vector<16x8xf32>
    %303 = vector.broadcast %301 : vector<1x8xf32> to vector<16x8xf32>
    %304 = arith.mulf %302, %303 : vector<16x8xf32>
    %305 = arith.minimumf %299, %304 : vector<16x8xf32>
    %306 = arith.addf %294, %305 : vector<16x8xf32>
    %307 = vector.extract_strided_slice %46 {offsets = [0, 21], sizes = [16, 1], strides = [1, 1]} : vector<16x32xf32> to vector<16x1xf32>
    %308 = vector.extract_strided_slice %53 {offsets = [21, 0], sizes = [1, 8], strides = [1, 1]} : vector<32x8xf32> to vector<1x8xf32>
    %309 = vector.broadcast %307 : vector<16x1xf32> to vector<16x8xf32>
    %310 = vector.broadcast %308 : vector<1x8xf32> to vector<16x8xf32>
    %311 = arith.mulf %309, %310 : vector<16x8xf32>
    %312 = vector.extract_strided_slice %49 {offsets = [0, 21], sizes = [16, 1], strides = [1, 1]} : vector<16x32xf32> to vector<16x1xf32>
    %313 = vector.extract_strided_slice %50 {offsets = [21, 0], sizes = [1, 8], strides = [1, 1]} : vector<32x8xf32> to vector<1x8xf32>
    %314 = vector.broadcast %312 : vector<16x1xf32> to vector<16x8xf32>
    %315 = vector.broadcast %313 : vector<1x8xf32> to vector<16x8xf32>
    %316 = arith.mulf %314, %315 : vector<16x8xf32>
    %317 = arith.minimumf %311, %316 : vector<16x8xf32>
    %318 = arith.addf %306, %317 : vector<16x8xf32>
    %319 = vector.extract_strided_slice %46 {offsets = [0, 22], sizes = [16, 1], strides = [1, 1]} : vector<16x32xf32> to vector<16x1xf32>
    %320 = vector.extract_strided_slice %53 {offsets = [22, 0], sizes = [1, 8], strides = [1, 1]} : vector<32x8xf32> to vector<1x8xf32>
    %321 = vector.broadcast %319 : vector<16x1xf32> to vector<16x8xf32>
    %322 = vector.broadcast %320 : vector<1x8xf32> to vector<16x8xf32>
    %323 = arith.mulf %321, %322 : vector<16x8xf32>
    %324 = vector.extract_strided_slice %49 {offsets = [0, 22], sizes = [16, 1], strides = [1, 1]} : vector<16x32xf32> to vector<16x1xf32>
    %325 = vector.extract_strided_slice %50 {offsets = [22, 0], sizes = [1, 8], strides = [1, 1]} : vector<32x8xf32> to vector<1x8xf32>
    %326 = vector.broadcast %324 : vector<16x1xf32> to vector<16x8xf32>
    %327 = vector.broadcast %325 : vector<1x8xf32> to vector<16x8xf32>
    %328 = arith.mulf %326, %327 : vector<16x8xf32>
    %329 = arith.minimumf %323, %328 : vector<16x8xf32>
    %330 = arith.addf %318, %329 : vector<16x8xf32>
    %331 = vector.extract_strided_slice %46 {offsets = [0, 23], sizes = [16, 1], strides = [1, 1]} : vector<16x32xf32> to vector<16x1xf32>
    %332 = vector.extract_strided_slice %53 {offsets = [23, 0], sizes = [1, 8], strides = [1, 1]} : vector<32x8xf32> to vector<1x8xf32>
    %333 = vector.broadcast %331 : vector<16x1xf32> to vector<16x8xf32>
    %334 = vector.broadcast %332 : vector<1x8xf32> to vector<16x8xf32>
    %335 = arith.mulf %333, %334 : vector<16x8xf32>
    %336 = vector.extract_strided_slice %49 {offsets = [0, 23], sizes = [16, 1], strides = [1, 1]} : vector<16x32xf32> to vector<16x1xf32>
    %337 = vector.extract_strided_slice %50 {offsets = [23, 0], sizes = [1, 8], strides = [1, 1]} : vector<32x8xf32> to vector<1x8xf32>
    %338 = vector.broadcast %336 : vector<16x1xf32> to vector<16x8xf32>
    %339 = vector.broadcast %337 : vector<1x8xf32> to vector<16x8xf32>
    %340 = arith.mulf %338, %339 : vector<16x8xf32>
    %341 = arith.minimumf %335, %340 : vector<16x8xf32>
    %342 = arith.addf %330, %341 : vector<16x8xf32>
    %343 = vector.extract_strided_slice %46 {offsets = [0, 24], sizes = [16, 1], strides = [1, 1]} : vector<16x32xf32> to vector<16x1xf32>
    %344 = vector.extract_strided_slice %53 {offsets = [24, 0], sizes = [1, 8], strides = [1, 1]} : vector<32x8xf32> to vector<1x8xf32>
    %345 = vector.broadcast %343 : vector<16x1xf32> to vector<16x8xf32>
    %346 = vector.broadcast %344 : vector<1x8xf32> to vector<16x8xf32>
    %347 = arith.mulf %345, %346 : vector<16x8xf32>
    %348 = vector.extract_strided_slice %49 {offsets = [0, 24], sizes = [16, 1], strides = [1, 1]} : vector<16x32xf32> to vector<16x1xf32>
    %349 = vector.extract_strided_slice %50 {offsets = [24, 0], sizes = [1, 8], strides = [1, 1]} : vector<32x8xf32> to vector<1x8xf32>
    %350 = vector.broadcast %348 : vector<16x1xf32> to vector<16x8xf32>
    %351 = vector.broadcast %349 : vector<1x8xf32> to vector<16x8xf32>
    %352 = arith.mulf %350, %351 : vector<16x8xf32>
    %353 = arith.minimumf %347, %352 : vector<16x8xf32>
    %354 = arith.addf %342, %353 : vector<16x8xf32>
    %355 = vector.extract_strided_slice %46 {offsets = [0, 25], sizes = [16, 1], strides = [1, 1]} : vector<16x32xf32> to vector<16x1xf32>
    %356 = vector.extract_strided_slice %53 {offsets = [25, 0], sizes = [1, 8], strides = [1, 1]} : vector<32x8xf32> to vector<1x8xf32>
    %357 = vector.broadcast %355 : vector<16x1xf32> to vector<16x8xf32>
    %358 = vector.broadcast %356 : vector<1x8xf32> to vector<16x8xf32>
    %359 = arith.mulf %357, %358 : vector<16x8xf32>
    %360 = vector.extract_strided_slice %49 {offsets = [0, 25], sizes = [16, 1], strides = [1, 1]} : vector<16x32xf32> to vector<16x1xf32>
    %361 = vector.extract_strided_slice %50 {offsets = [25, 0], sizes = [1, 8], strides = [1, 1]} : vector<32x8xf32> to vector<1x8xf32>
    %362 = vector.broadcast %360 : vector<16x1xf32> to vector<16x8xf32>
    %363 = vector.broadcast %361 : vector<1x8xf32> to vector<16x8xf32>
    %364 = arith.mulf %362, %363 : vector<16x8xf32>
    %365 = arith.minimumf %359, %364 : vector<16x8xf32>
    %366 = arith.addf %354, %365 : vector<16x8xf32>
    %367 = vector.extract_strided_slice %46 {offsets = [0, 26], sizes = [16, 1], strides = [1, 1]} : vector<16x32xf32> to vector<16x1xf32>
    %368 = vector.extract_strided_slice %53 {offsets = [26, 0], sizes = [1, 8], strides = [1, 1]} : vector<32x8xf32> to vector<1x8xf32>
    %369 = vector.broadcast %367 : vector<16x1xf32> to vector<16x8xf32>
    %370 = vector.broadcast %368 : vector<1x8xf32> to vector<16x8xf32>
    %371 = arith.mulf %369, %370 : vector<16x8xf32>
    %372 = vector.extract_strided_slice %49 {offsets = [0, 26], sizes = [16, 1], strides = [1, 1]} : vector<16x32xf32> to vector<16x1xf32>
    %373 = vector.extract_strided_slice %50 {offsets = [26, 0], sizes = [1, 8], strides = [1, 1]} : vector<32x8xf32> to vector<1x8xf32>
    %374 = vector.broadcast %372 : vector<16x1xf32> to vector<16x8xf32>
    %375 = vector.broadcast %373 : vector<1x8xf32> to vector<16x8xf32>
    %376 = arith.mulf %374, %375 : vector<16x8xf32>
    %377 = arith.minimumf %371, %376 : vector<16x8xf32>
    %378 = arith.addf %366, %377 : vector<16x8xf32>
    %379 = vector.extract_strided_slice %46 {offsets = [0, 27], sizes = [16, 1], strides = [1, 1]} : vector<16x32xf32> to vector<16x1xf32>
    %380 = vector.extract_strided_slice %53 {offsets = [27, 0], sizes = [1, 8], strides = [1, 1]} : vector<32x8xf32> to vector<1x8xf32>
    %381 = vector.broadcast %379 : vector<16x1xf32> to vector<16x8xf32>
    %382 = vector.broadcast %380 : vector<1x8xf32> to vector<16x8xf32>
    %383 = arith.mulf %381, %382 : vector<16x8xf32>
    %384 = vector.extract_strided_slice %49 {offsets = [0, 27], sizes = [16, 1], strides = [1, 1]} : vector<16x32xf32> to vector<16x1xf32>
    %385 = vector.extract_strided_slice %50 {offsets = [27, 0], sizes = [1, 8], strides = [1, 1]} : vector<32x8xf32> to vector<1x8xf32>
    %386 = vector.broadcast %384 : vector<16x1xf32> to vector<16x8xf32>
    %387 = vector.broadcast %385 : vector<1x8xf32> to vector<16x8xf32>
    %388 = arith.mulf %386, %387 : vector<16x8xf32>
    %389 = arith.minimumf %383, %388 : vector<16x8xf32>
    %390 = arith.addf %378, %389 : vector<16x8xf32>
    %391 = vector.extract_strided_slice %46 {offsets = [0, 28], sizes = [16, 1], strides = [1, 1]} : vector<16x32xf32> to vector<16x1xf32>
    %392 = vector.extract_strided_slice %53 {offsets = [28, 0], sizes = [1, 8], strides = [1, 1]} : vector<32x8xf32> to vector<1x8xf32>
    %393 = vector.broadcast %391 : vector<16x1xf32> to vector<16x8xf32>
    %394 = vector.broadcast %392 : vector<1x8xf32> to vector<16x8xf32>
    %395 = arith.mulf %393, %394 : vector<16x8xf32>
    %396 = vector.extract_strided_slice %49 {offsets = [0, 28], sizes = [16, 1], strides = [1, 1]} : vector<16x32xf32> to vector<16x1xf32>
    %397 = vector.extract_strided_slice %50 {offsets = [28, 0], sizes = [1, 8], strides = [1, 1]} : vector<32x8xf32> to vector<1x8xf32>
    %398 = vector.broadcast %396 : vector<16x1xf32> to vector<16x8xf32>
    %399 = vector.broadcast %397 : vector<1x8xf32> to vector<16x8xf32>
    %400 = arith.mulf %398, %399 : vector<16x8xf32>
    %401 = arith.minimumf %395, %400 : vector<16x8xf32>
    %402 = arith.addf %390, %401 : vector<16x8xf32>
    %403 = vector.extract_strided_slice %46 {offsets = [0, 29], sizes = [16, 1], strides = [1, 1]} : vector<16x32xf32> to vector<16x1xf32>
    %404 = vector.extract_strided_slice %53 {offsets = [29, 0], sizes = [1, 8], strides = [1, 1]} : vector<32x8xf32> to vector<1x8xf32>
    %405 = vector.broadcast %403 : vector<16x1xf32> to vector<16x8xf32>
    %406 = vector.broadcast %404 : vector<1x8xf32> to vector<16x8xf32>
    %407 = arith.mulf %405, %406 : vector<16x8xf32>
    %408 = vector.extract_strided_slice %49 {offsets = [0, 29], sizes = [16, 1], strides = [1, 1]} : vector<16x32xf32> to vector<16x1xf32>
    %409 = vector.extract_strided_slice %50 {offsets = [29, 0], sizes = [1, 8], strides = [1, 1]} : vector<32x8xf32> to vector<1x8xf32>
    %410 = vector.broadcast %408 : vector<16x1xf32> to vector<16x8xf32>
    %411 = vector.broadcast %409 : vector<1x8xf32> to vector<16x8xf32>
    %412 = arith.mulf %410, %411 : vector<16x8xf32>
    %413 = arith.minimumf %407, %412 : vector<16x8xf32>
    %414 = arith.addf %402, %413 : vector<16x8xf32>
    %415 = vector.extract_strided_slice %46 {offsets = [0, 30], sizes = [16, 1], strides = [1, 1]} : vector<16x32xf32> to vector<16x1xf32>
    %416 = vector.extract_strided_slice %53 {offsets = [30, 0], sizes = [1, 8], strides = [1, 1]} : vector<32x8xf32> to vector<1x8xf32>
    %417 = vector.broadcast %415 : vector<16x1xf32> to vector<16x8xf32>
    %418 = vector.broadcast %416 : vector<1x8xf32> to vector<16x8xf32>
    %419 = arith.mulf %417, %418 : vector<16x8xf32>
    %420 = vector.extract_strided_slice %49 {offsets = [0, 30], sizes = [16, 1], strides = [1, 1]} : vector<16x32xf32> to vector<16x1xf32>
    %421 = vector.extract_strided_slice %50 {offsets = [30, 0], sizes = [1, 8], strides = [1, 1]} : vector<32x8xf32> to vector<1x8xf32>
    %422 = vector.broadcast %420 : vector<16x1xf32> to vector<16x8xf32>
    %423 = vector.broadcast %421 : vector<1x8xf32> to vector<16x8xf32>
    %424 = arith.mulf %422, %423 : vector<16x8xf32>
    %425 = arith.minimumf %419, %424 : vector<16x8xf32>
    %426 = arith.addf %414, %425 : vector<16x8xf32>
    %427 = vector.extract_strided_slice %46 {offsets = [0, 31], sizes = [16, 1], strides = [1, 1]} : vector<16x32xf32> to vector<16x1xf32>
    %428 = vector.extract_strided_slice %53 {offsets = [31, 0], sizes = [1, 8], strides = [1, 1]} : vector<32x8xf32> to vector<1x8xf32>
    %429 = vector.broadcast %427 : vector<16x1xf32> to vector<16x8xf32>
    %430 = vector.broadcast %428 : vector<1x8xf32> to vector<16x8xf32>
    %431 = arith.mulf %429, %430 : vector<16x8xf32>
    %432 = vector.extract_strided_slice %49 {offsets = [0, 31], sizes = [16, 1], strides = [1, 1]} : vector<16x32xf32> to vector<16x1xf32>
    %433 = vector.extract_strided_slice %50 {offsets = [31, 0], sizes = [1, 8], strides = [1, 1]} : vector<32x8xf32> to vector<1x8xf32>
    %434 = vector.broadcast %432 : vector<16x1xf32> to vector<16x8xf32>
    %435 = vector.broadcast %433 : vector<1x8xf32> to vector<16x8xf32>
    %436 = arith.mulf %434, %435 : vector<16x8xf32>
    %437 = arith.minimumf %431, %436 : vector<16x8xf32>
    %438 = arith.addf %426, %437 : vector<16x8xf32>
    %c0_31 = arith.constant 0 : index
    %439 = memref.load %arg11[%c0_31] : memref<3xf32, #tpu.memory_space<smem>>
    %440 = vector.extract_strided_slice %3 {offsets = [0, 0], sizes = [16, 1], strides = [1, 1]} : vector<16x3xf32> to vector<16x1xf32>
    %441 = vector.extract_strided_slice %7 {offsets = [0, 0], sizes = [1, 8], strides = [1, 1]} : vector<3x8xf32> to vector<1x8xf32>
    %442 = vector.broadcast %440 : vector<16x1xf32> to vector<16x8xf32>
    %443 = vector.broadcast %441 : vector<1x8xf32> to vector<16x8xf32>
    %444 = arith.subf %442, %443 : vector<16x8xf32>
    %445 = math.absf %444 : vector<16x8xf32>
    %cst_32 = arith.constant 0.000000e+00 : f32
    %446 = vector.broadcast %cst_32 : f32 to vector<16x8xf32>
    %447 = arith.subf %446, %445 : vector<16x8xf32>
    %448 = math.exp %447 : vector<16x8xf32>
    %449 = vector.broadcast %439 : f32 to vector<16x8xf32>
    %450 = arith.mulf %449, %448 : vector<16x8xf32>
    %451 = arith.addf %438, %450 : vector<16x8xf32>
    %c1 = arith.constant 1 : index
    %452 = memref.load %arg11[%c1] : memref<3xf32, #tpu.memory_space<smem>>
    %453 = vector.extract_strided_slice %3 {offsets = [0, 1], sizes = [16, 1], strides = [1, 1]} : vector<16x3xf32> to vector<16x1xf32>
    %454 = vector.extract_strided_slice %7 {offsets = [1, 0], sizes = [1, 8], strides = [1, 1]} : vector<3x8xf32> to vector<1x8xf32>
    %455 = vector.broadcast %453 : vector<16x1xf32> to vector<16x8xf32>
    %456 = vector.broadcast %454 : vector<1x8xf32> to vector<16x8xf32>
    %457 = arith.subf %455, %456 : vector<16x8xf32>
    %458 = math.absf %457 : vector<16x8xf32>
    %cst_33 = arith.constant 0.000000e+00 : f32
    %459 = vector.broadcast %cst_33 : f32 to vector<16x8xf32>
    %460 = arith.subf %459, %458 : vector<16x8xf32>
    %461 = math.exp %460 : vector<16x8xf32>
    %462 = vector.broadcast %452 : f32 to vector<16x8xf32>
    %463 = arith.mulf %462, %461 : vector<16x8xf32>
    %464 = arith.addf %451, %463 : vector<16x8xf32>
    %c2 = arith.constant 2 : index
    %465 = memref.load %arg11[%c2] : memref<3xf32, #tpu.memory_space<smem>>
    %466 = vector.extract_strided_slice %3 {offsets = [0, 2], sizes = [16, 1], strides = [1, 1]} : vector<16x3xf32> to vector<16x1xf32>
    %467 = vector.extract_strided_slice %7 {offsets = [2, 0], sizes = [1, 8], strides = [1, 1]} : vector<3x8xf32> to vector<1x8xf32>
    %468 = vector.broadcast %466 : vector<16x1xf32> to vector<16x8xf32>
    %469 = vector.broadcast %467 : vector<1x8xf32> to vector<16x8xf32>
    %470 = arith.subf %468, %469 : vector<16x8xf32>
    %471 = math.absf %470 : vector<16x8xf32>
    %cst_34 = arith.constant 0.000000e+00 : f32
    %472 = vector.broadcast %cst_34 : f32 to vector<16x8xf32>
    %473 = arith.subf %472, %471 : vector<16x8xf32>
    %474 = math.exp %473 : vector<16x8xf32>
    %475 = vector.broadcast %465 : f32 to vector<16x8xf32>
    %476 = arith.mulf %475, %474 : vector<16x8xf32>
    %477 = arith.addf %464, %476 : vector<16x8xf32>
    %cst_35 = arith.constant 3.125000e-02 : f32
    %478 = vector.broadcast %cst_35 : f32 to vector<16x8xf32>
    %479 = arith.mulf %477, %478 : vector<16x8xf32>
    %cst_36 = arith.constant dense<0xFF800000> : vector<16xf32>
    %480 = vector.multi_reduction <maximumf>, %479, %cst_36 [1] : vector<16x8xf32> to vector<16xf32>
    %481 = vector.shape_cast %480 : vector<16xf32> to vector<16x1xf32>
    %482 = vector.broadcast %481 : vector<16x1xf32> to vector<16x8xf32>
    %483 = arith.subf %479, %482 : vector<16x8xf32>
    %484 = math.exp %483 : vector<16x8xf32>
    %cst_37 = arith.constant dense<0.000000e+00> : vector<16xf32>
    %485 = vector.multi_reduction <add>, %484, %cst_37 [1] : vector<16x8xf32> to vector<16xf32>
    %486 = vector.shape_cast %485 : vector<16xf32> to vector<16x1xf32>
    %487 = tpu.reciprocal %486 {approx = true} : vector<16x1xf32> -> vector<16x1xf32>
    %488 = arith.mulf %486, %487 : vector<16x1xf32>
    %cst_38 = arith.constant 2.000000e+00 : f32
    %489 = vector.broadcast %cst_38 : f32 to vector<16x1xf32>
    %490 = arith.subf %489, %488 : vector<16x1xf32>
    %491 = arith.mulf %487, %490 : vector<16x1xf32>
    %492 = vector.broadcast %491 : vector<16x1xf32> to vector<16x8xf32>
    %493 = arith.mulf %484, %492 : vector<16x8xf32>
    %cst_39 = arith.constant dense<0.000000e+00> : vector<16x32xf32>
    %494 = tpu.matmul %493, %13, %cst_39 {dimension_numbers = #tpu.dot_dimension_numbers<[1], [0], [0], [1], [0, 0, 1, 1], [], []>} : vector<16x8xf32>, vector<8x32xf32>, vector<16x32xf32> -> vector<16x32xf32>
    %c0_40 = arith.constant 0 : index
    %c0_41 = arith.constant 0 : index
    %495 = vector.load %arg9[%c0_40, %c0_41] : memref<32x32xf32, #tpu.memory_space<vmem>>, vector<32x32xf32>
    %cst_42 = arith.constant dense<0.000000e+00> : vector<16x32xf32>
    %496 = tpu.matmul %494, %495, %cst_42 {dimension_numbers = #tpu.dot_dimension_numbers<[1], [1], [0], [0], [0, 0, 1, 0], [], []>} : vector<16x32xf32>, vector<32x32xf32>, vector<16x32xf32> -> vector<16x32xf32>
    %c0_43 = arith.constant 0 : index
    %c0_44 = arith.constant 0 : index
    %497 = vector.load %arg10[%c0_43, %c0_44] : memref<1x32xf32, #tpu.memory_space<vmem>>, vector<1x32xf32>
    %498 = vector.broadcast %497 : vector<1x32xf32> to vector<16x32xf32>
    %499 = arith.addf %496, %498 : vector<16x32xf32>
    %c0_45 = arith.constant 0 : index
    %c0_46 = arith.constant 0 : index
    %c0_47 = arith.constant 0 : index
    %500 = vector.load %arg12[%c0_45, %c0_46, %c0_47] : memref<1x16x32xf32, #tpu.memory_space<vmem>>, vector<1x16x32xf32>
    %501 = vector.shape_cast %500 : vector<1x16x32xf32> to vector<16x32xf32>
    %502 = vector.shape_cast %499 : vector<16x32xf32> to vector<1x16x32xf32>
    tpu.vector_store %arg12[%c0_45, %c0_46, %c0_47], %502 {strides = array<i32>} : memref<1x16x32xf32, #tpu.memory_space<vmem>>, vector<1x16x32xf32>,
    return
  }
  func.func @transform_0(%arg0: i32, %arg1: i32) -> (i32, i32, i32) {
    %c0_i32 = arith.constant 0 : i32
    %c0_i32_0 = arith.constant 0 : i32
    return %arg0, %arg1, %c0_i32 : i32, i32, i32
  }
  func.func @transform_1(%arg0: i32, %arg1: i32) -> (i32, i32, i32) {
    %c0_i32 = arith.constant 0 : i32
    %c0_i32_0 = arith.constant 0 : i32
    return %arg0, %arg1, %c0_i32 : i32, i32, i32
  }
  func.func @transform_2(%arg0: i32, %arg1: i32) -> (i32, i32, i32) {
    %c0_i32 = arith.constant 0 : i32
    %c0_i32_0 = arith.constant 0 : i32
    %c0_i32_1 = arith.constant 0 : i32
    return %arg0, %c0_i32, %c0_i32_0 : i32, i32, i32
  }
  func.func @transform_3(%arg0: i32, %arg1: i32) -> (i32, i32, i32) {
    %c0_i32 = arith.constant 0 : i32
    %c0_i32_0 = arith.constant 0 : i32
    %c0_i32_1 = arith.constant 0 : i32
    return %arg0, %c0_i32, %c0_i32_0 : i32, i32, i32
  }
  func.func @transform_4(%arg0: i32, %arg1: i32) -> (i32, i32) {
    %c0_i32 = arith.constant 0 : i32
    %c0_i32_0 = arith.constant 0 : i32
    %c0_i32_1 = arith.constant 0 : i32
    return %c0_i32, %c0_i32_0 : i32, i32
  }
  func.func @transform_5(%arg0: i32, %arg1: i32) -> (i32, i32) {
    %c0_i32 = arith.constant 0 : i32
    %c0_i32_0 = arith.constant 0 : i32
    %c0_i32_1 = arith.constant 0 : i32
    return %c0_i32, %c0_i32_0 : i32, i32
  }
  func.func @transform_6(%arg0: i32, %arg1: i32) -> (i32, i32) {
    %c0_i32 = arith.constant 0 : i32
    %c0_i32_0 = arith.constant 0 : i32
    %c0_i32_1 = arith.constant 0 : i32
    return %c0_i32, %c0_i32_0 : i32, i32
  }
  func.func @transform_7(%arg0: i32, %arg1: i32) -> (i32, i32) {
    %c0_i32 = arith.constant 0 : i32
    %c0_i32_0 = arith.constant 0 : i32
    %c0_i32_1 = arith.constant 0 : i32
    return %c0_i32, %c0_i32_0 : i32, i32
  }
  func.func @transform_8(%arg0: i32, %arg1: i32) -> (i32, i32) {
    %c0_i32 = arith.constant 0 : i32
    %c0_i32_0 = arith.constant 0 : i32
    %c0_i32_1 = arith.constant 0 : i32
    return %c0_i32, %c0_i32_0 : i32, i32
  }
  func.func @transform_9(%arg0: i32, %arg1: i32) -> i32 {
    %c0_i32 = arith.constant 0 : i32
    %c0_i32_0 = arith.constant 0 : i32
    return %c0_i32 : i32
  }
  func.func @transform_10(%arg0: i32, %arg1: i32) -> (i32, i32, i32) {
    %c0_i32 = arith.constant 0 : i32
    %c0_i32_0 = arith.constant 0 : i32
    return %arg0, %arg1, %c0_i32 : i32, i32, i32
  }
}

</mosaic_0001>

<llo_original>
// kernel: tpu_custom_call.1
$region0: #{tpu_custom_call.1}
  #allocation0 [shape = 'u32[]', space=smem, size = 0x4, offset = 0x4, fixed_abs, tag = 'smem constant byte address 0x4 - core index']
  #allocation1 [shape = 'u32[144,128]{1,0:T(1,128)}', space=vmem, size = 0x12000, scoped, tag = 'internal scratch']
  %s0 = inlined_call_operand.vmem [shape: f32[2,16,32], index: 0, kind: input, shape index: {}]
  %s1 = inlined_call_operand.vmem [shape: f32[2,16,3], index: 1, kind: input, shape index: {}]
  %s2 = inlined_call_operand.vmem [shape: f32[2,8,8], index: 2, kind: input, shape index: {}]
  %s3 = inlined_call_operand.vmem [shape: f32[2,3,8], index: 3, kind: input, shape index: {}]
  %s4 = inlined_call_operand.vmem [shape: f32[32,32], index: 4, kind: input, shape index: {}]
  %s5 = inlined_call_operand.vmem [shape: f32[32,8], index: 5, kind: input, shape index: {}]
  %s6 = inlined_call_operand.vmem [shape: f32[32,8], index: 6, kind: input, shape index: {}]
  %s7 = inlined_call_operand.vmem [shape: f32[32,32], index: 7, kind: input, shape index: {}]
  %s8 = inlined_call_operand.vmem [shape: f32[1,32], index: 8, kind: input, shape index: {}]
  %s9 = inlined_call_operand.vmem [shape: f32[3], index: 9, kind: input, shape index: {}]
  %s10 = inlined_call_operand.hbm [shape: f32[2,16,32], index: 10, kind: output, shape index: {}]
  %s11 = sld [smem:[#allocation0]]
  $region77: #{tpu_custom_call.1} parent=0
    _
  %s13 = ssub.s32 1, %s11
  %s14 = scalar_select 0, %s13, %s11
  $region1: #{tpu_custom_call.1} parent=0
    #allocation2 [shape = 'u8[512]{0}', space=smem, size = 0x200, scoped, tag = 'input window, operand 9, single buffered']
    #allocation3 [shape = 's32[2]{0}', space=sflag, size = 0x8, scoped, tag = 'scoped memory for tpu_custom_call.1']
    #allocation4 [shape = 's32[2]{0}', space=sflag, size = 0x8, scoped, tag = 'scoped memory for tpu_custom_call.1']
    #allocation5 [shape = 'u8[16384]{0}', space=vmem, size = 0x4000, scoped, tag = 'output window, operand 0']
    %15 = vsyncpa [#allocation4], 0
    %16 = vsyncpa [#allocation3], 0
    %s17 = scalar_lea.sflag [#allocation3], 1
    %18 = vsyncpa %s17, 0
    loop: start=0, step=1, limit=4
    $region2: #{tpu_custom_call.1} parent=1 // loop_pre_header
      _
    $region3: #{tpu_custom_call.1} parent=1 // loop_header
      %s20 = sphi 0, %s24
      %p21 = scmp.ge.s32.totalorder %s20, 4
      %s27 = sphi 0, %s39
      %s28 = sphi 0, %s35
      %s29 = sphi 0, %s27
      %s30 = sphi 0, %s28
      %s31 = sphi 0, %s29
      %s32 = sphi 0, %s30
      %s44 = sphi 0, %s46
      %s47 = sphi 0, %s44
      %s48 = sphi 0, %s47
      %s64 = sphi 0, %s48
      %s72 = sphi 0, %s74
      %s75 = sphi 0, %s72
      %s76 = sphi 0, %s75
      %s92 = sphi 0, %s76
      %s98 = sphi 0, %s100
      %s101 = sphi 0, %s98
      %s102 = sphi 0, %s101
      %s118 = sphi 0, %s102
      %s124 = sphi 0, %s126
      %s127 = sphi 0, %s124
      %s128 = sphi 0, %s127
      %s144 = sphi 0, %s128
      %s148 = sphi 0, %s148
      %s150 = sphi 0, %s148
      %s151 = sphi 0, %s150
      %s165 = sphi 0, %s151
      %s169 = sphi 0, %s169
      %s171 = sphi 0, %s169
      %s172 = sphi 0, %s171
      %s186 = sphi 0, %s172
      %s190 = sphi 0, %s190
      %s192 = sphi 0, %s190
      %s193 = sphi 0, %s192
      %s207 = sphi 0, %s193
      %s211 = sphi 0, %s211
      %s213 = sphi 0, %s211
      %s214 = sphi 0, %s213
      %s228 = sphi 0, %s214
      %s232 = sphi 0, %s232
      %s234 = sphi 0, %s232
      %s235 = sphi 0, %s234
      %s249 = sphi 0, %s235
      %s253 = sphi 0, %s253
      %s255 = sphi 0, %s253
      %s256 = sphi 0, %s255
      %s270 = sphi 0, %s256
      %s278 = sphi 0, %s280
      %s281 = sphi 0, %s278
      %s282 = sphi 0, %s281
      %s298 = sphi 0, %s282
    $region4: #{tpu_custom_call.1} parent=1 // loop_header_branch
      %23 = sbr.rel (%p21) target = $region8
    $region5: #{tpu_custom_call.1} parent=1 // loop_body
      %s25 = ssub.s32 %s20, 1
      %s26 = ssub.s32 %s20, 2
      %s33 = sadd.s32 1, %s28
      %p34 = scmp.ge.s32.totalorder %s33, 1
      %s35 = scalar_select %p34, 0, %s33
      %s36 = sadd.s32 1, %s27
      %s37 = scalar_select %p34, %s36, %s27
      %p38 = scmp.ge.s32.totalorder %s37, 2
      %s39 = scalar_select %p38, 0, %s37
      %s40 = ssub.s32 %s27, %s39
      %s41 = ssub.s32 %s28, %s35
      %s42 = sor.u32 %s40, %s41
      %p43 = scmp.eq.s32.totalorder %s42, 0
      %s45 = sadd.s32 %s44, 1
      %s46 = scalar_select %p43, %s44, %s45
      %p49 = pneg %p43
      %p50 = scmp.eq.s32.totalorder %s20, 1
      %p51 = por %p49, %p50
      %p52 = scmp.ne.s32.totalorder %s44, %s47
      %p53 = scmp.eq.s32.totalorder %s20, 0
      %p54 = por %p52, %p53
      %p55 = scmp.ne.s32.totalorder %s44, %s47
      %p56 = scmp.eq.s32.totalorder %s25, 1
      %p57 = por %p55, %p56
      %p58 = scmp.ne.s32.totalorder %s47, %s48
      %p59 = scmp.eq.s32.totalorder %s25, 0
      %p60 = por %p58, %p59
      %p61 = scmp.ne.s32.totalorder %s47, %s48
      %p62 = scmp.eq.s32.totalorder %s26, 1
      %p63 = por %p61, %p62
      %p65 = scmp.ne.s32.totalorder %s48, %s64
      %p66 = scmp.eq.s32.totalorder %s26, 0
      %p67 = por %p65, %p66
      %s68 = ssub.s32 %s27, %s39
      %s69 = ssub.s32 %s28, %s35
      %s70 = sor.u32 %s68, %s69
      %p71 = scmp.eq.s32.totalorder %s70, 0
      %s73 = sadd.s32 %s72, 1
      %s74 = scalar_select %p71, %s72, %s73
      %p77 = pneg %p71
      %p78 = scmp.eq.s32.totalorder %s20, 1
      %p79 = por %p77, %p78
      %p80 = scmp.ne.s32.totalorder %s72, %s75
      %p81 = scmp.eq.s32.totalorder %s20, 0
      %p82 = por %p80, %p81
      %p83 = scmp.ne.s32.totalorder %s72, %s75
      %p84 = scmp.eq.s32.totalorder %s25, 1
      %p85 = por %p83, %p84
      %p86 = scmp.ne.s32.totalorder %s75, %s76
      %p87 = scmp.eq.s32.totalorder %s25, 0
      %p88 = por %p86, %p87
      %p89 = scmp.ne.s32.totalorder %s75, %s76
      %p90 = scmp.eq.s32.totalorder %s26, 1
      %p91 = por %p89, %p90
      %p93 = scmp.ne.s32.totalorder %s76, %s92
      %p94 = scmp.eq.s32.totalorder %s26, 0
      %p95 = por %p93, %p94
      %s96 = ssub.s32 %s27, %s39
      %p97 = scmp.eq.s32.totalorder %s96, 0
      %s99 = sadd.s32 %s98, 1
      %s100 = scalar_select %p97, %s98, %s99
      %p103 = pneg %p97
      %p104 = scmp.eq.s32.totalorder %s20, 1
      %p105 = por %p103, %p104
      %p106 = scmp.ne.s32.totalorder %s98, %s101
      %p107 = scmp.eq.s32.totalorder %s20, 0
      %p108 = por %p106, %p107
      %p109 = scmp.ne.s32.totalorder %s98, %s101
      %p110 = scmp.eq.s32.totalorder %s25, 1
      %p111 = por %p109, %p110
      %p112 = scmp.ne.s32.totalorder %s101, %s102
      %p113 = scmp.eq.s32.totalorder %s25, 0
      %p114 = por %p112, %p113
      %p115 = scmp.ne.s32.totalorder %s101, %s102
      %p116 = scmp.eq.s32.totalorder %s26, 1
      %p117 = por %p115, %p116
      %p119 = scmp.ne.s32.totalorder %s102, %s118
      %p120 = scmp.eq.s32.totalorder %s26, 0
      %p121 = por %p119, %p120
      %s122 = ssub.s32 %s27, %s39
      %p123 = scmp.eq.s32.totalorder %s122, 0
      %s125 = sadd.s32 %s124, 1
      %s126 = scalar_select %p123, %s124, %s125
      %p129 = pneg %p123
      %p130 = scmp.eq.s32.totalorder %s20, 1
      %p131 = por %p129, %p130
      %p132 = scmp.ne.s32.totalorder %s124, %s127
      %p133 = scmp.eq.s32.totalorder %s20, 0
      %p134 = por %p132, %p133
      %p135 = scmp.ne.s32.totalorder %s124, %s127
      %p136 = scmp.eq.s32.totalorder %s25, 1
      %p137 = por %p135, %p136
      %p138 = scmp.ne.s32.totalorder %s127, %s128
      %p139 = scmp.eq.s32.totalorder %s25, 0
      %p140 = por %p138, %p139
      %p141 = scmp.ne.s32.totalorder %s127, %s128
      %p142 = scmp.eq.s32.totalorder %s26, 1
      %p143 = por %p141, %p142
      %p145 = scmp.ne.s32.totalorder %s128, %s144
      %p146 = scmp.eq.s32.totalorder %s26, 0
      %p147 = por %p145, %p146
      %s149 = sadd.s32 %s148, 1
      %p152 = scmp.eq.s32.totalorder %s20, 1
      %p153 = scmp.ne.s32.totalorder %s148, %s150
      %p154 = scmp.eq.s32.totalorder %s20, 0
      %p155 = por %p153, %p154
      %p156 = scmp.ne.s32.totalorder %s148, %s150
      %p157 = scmp.eq.s32.totalorder %s25, 1
      %p158 = por %p156, %p157
      %p159 = scmp.ne.s32.totalorder %s150, %s151
      %p160 = scmp.eq.s32.totalorder %s25, 0
      %p161 = por %p159, %p160
      %p162 = scmp.ne.s32.totalorder %s150, %s151
      %p163 = scmp.eq.s32.totalorder %s26, 1
      %p164 = por %p162, %p163
      %p166 = scmp.ne.s32.totalorder %s151, %s165
      %p167 = scmp.eq.s32.totalorder %s26, 0
      %p168 = por %p166, %p167
      %s170 = sadd.s32 %s169, 1
      %p173 = scmp.eq.s32.totalorder %s20, 1
      %p174 = scmp.ne.s32.totalorder %s169, %s171
      %p175 = scmp.eq.s32.totalorder %s20, 0
      %p176 = por %p174, %p175
      %p177 = scmp.ne.s32.totalorder %s169, %s171
      %p178 = scmp.eq.s32.totalorder %s25, 1
      %p179 = por %p177, %p178
      %p180 = scmp.ne.s32.totalorder %s171, %s172
      %p181 = scmp.eq.s32.totalorder %s25, 0
      %p182 = por %p180, %p181
      %p183 = scmp.ne.s32.totalorder %s171, %s172
      %p184 = scmp.eq.s32.totalorder %s26, 1
      %p185 = por %p183, %p184
      %p187 = scmp.ne.s32.totalorder %s172, %s186
      %p188 = scmp.eq.s32.totalorder %s26, 0
      %p189 = por %p187, %p188
      %s191 = sadd.s32 %s190, 1
      %p194 = scmp.eq.s32.totalorder %s20, 1
      %p195 = scmp.ne.s32.totalorder %s190, %s192
      %p196 = scmp.eq.s32.totalorder %s20, 0
      %p197 = por %p195, %p196
      %p198 = scmp.ne.s32.totalorder %s190, %s192
      %p199 = scmp.eq.s32.totalorder %s25, 1
      %p200 = por %p198, %p199
      %p201 = scmp.ne.s32.totalorder %s192, %s193
      %p202 = scmp.eq.s32.totalorder %s25, 0
      %p203 = por %p201, %p202
      %p204 = scmp.ne.s32.totalorder %s192, %s193
      %p205 = scmp.eq.s32.totalorder %s26, 1
      %p206 = por %p204, %p205
      %p208 = scmp.ne.s32.totalorder %s193, %s207
      %p209 = scmp.eq.s32.totalorder %s26, 0
      %p210 = por %p208, %p209
      %s212 = sadd.s32 %s211, 1
      %p215 = scmp.eq.s32.totalorder %s20, 1
      %p216 = scmp.ne.s32.totalorder %s211, %s213
      %p217 = scmp.eq.s32.totalorder %s20, 0
      %p218 = por %p216, %p217
      %p219 = scmp.ne.s32.totalorder %s211, %s213
      %p220 = scmp.eq.s32.totalorder %s25, 1
      %p221 = por %p219, %p220
      %p222 = scmp.ne.s32.totalorder %s213, %s214
      %p223 = scmp.eq.s32.totalorder %s25, 0
      %p224 = por %p222, %p223
      %p225 = scmp.ne.s32.totalorder %s213, %s214
      %p226 = scmp.eq.s32.totalorder %s26, 1
      %p227 = por %p225, %p226
      %p229 = scmp.ne.s32.totalorder %s214, %s228
      %p230 = scmp.eq.s32.totalorder %s26, 0
      %p231 = por %p229, %p230
      %s233 = sadd.s32 %s232, 1
      %p236 = scmp.eq.s32.totalorder %s20, 1
      %p237 = scmp.ne.s32.totalorder %s232, %s234
      %p238 = scmp.eq.s32.totalorder %s20, 0
      %p239 = por %p237, %p238
      %p240 = scmp.ne.s32.totalorder %s232, %s234
      %p241 = scmp.eq.s32.totalorder %s25, 1
      %p242 = por %p240, %p241
      %p243 = scmp.ne.s32.totalorder %s234, %s235
      %p244 = scmp.eq.s32.totalorder %s25, 0
      %p245 = por %p243, %p244
      %p246 = scmp.ne.s32.totalorder %s234, %s235
      %p247 = scmp.eq.s32.totalorder %s26, 1
      %p248 = por %p246, %p247
      %p250 = scmp.ne.s32.totalorder %s235, %s249
      %p251 = scmp.eq.s32.totalorder %s26, 0
      %p252 = por %p250, %p251
      %s254 = sadd.s32 %s253, 1
      %p257 = scmp.eq.s32.totalorder %s20, 1
      %p258 = scmp.ne.s32.totalorder %s253, %s255
      %p259 = scmp.eq.s32.totalorder %s20, 0
      %p260 = por %p258, %p259
      %p261 = scmp.ne.s32.totalorder %s253, %s255
      %p262 = scmp.eq.s32.totalorder %s25, 1
      %p263 = por %p261, %p262
      %p264 = scmp.ne.s32.totalorder %s255, %s256
      %p265 = scmp.eq.s32.totalorder %s25, 0
      %p266 = por %p264, %p265
      %p267 = scmp.ne.s32.totalorder %s255, %s256
      %p268 = scmp.eq.s32.totalorder %s26, 1
      %p269 = por %p267, %p268
      %p271 = scmp.ne.s32.totalorder %s256, %s270
      %p272 = scmp.eq.s32.totalorder %s26, 0
      %p273 = por %p271, %p272
      %s274 = ssub.s32 %s27, %s39
      %s275 = ssub.s32 %s28, %s35
      %s276 = sor.u32 %s274, %s275
      %p277 = scmp.eq.s32.totalorder %s276, 0
      %s279 = sadd.s32 %s278, 1
      %s280 = scalar_select %p277, %s278, %s279
      %p283 = pneg %p277
      %p284 = scmp.eq.s32.totalorder %s20, 1
      %p285 = por %p283, %p284
      %p286 = scmp.ne.s32.totalorder %s278, %s281
      %p287 = scmp.eq.s32.totalorder %s20, 0
      %p288 = por %p286, %p287
      %p289 = scmp.ne.s32.totalorder %s278, %s281
      %p290 = scmp.eq.s32.totalorder %s25, 1
      %p291 = por %p289, %p290
      %p292 = scmp.ne.s32.totalorder %s281, %s282
      %p293 = scmp.eq.s32.totalorder %s25, 0
      %p294 = por %p292, %p293
      %p295 = scmp.ne.s32.totalorder %s281, %s282
      %p296 = scmp.eq.s32.totalorder %s26, 1
      %p297 = por %p295, %p296
      %p299 = scmp.ne.s32.totalorder %s282, %s298
      %p300 = scmp.eq.s32.totalorder %s26, 0
      %p301 = por %p299, %p300
      %p302 = scmp.le.s32.totalorder 1, %s20
      %p303 = scmp.lt.s32.totalorder %s20, 3
      %p304 = pnand %p302, %p303
      %p305 = pneg %p304
      // Predicated region
      $region9: #{tpu_custom_call.1} parent=5 // pred_check
        _
      $region10: #{tpu_custom_call.1} parent=5 // pred_check_branch
        %307 = sbr.rel (%p304) target = $region12
      $region11: #{tpu_custom_call.1} parent=5 // pred_region
        %s308 = ssub.s32 %s20, 1
        // Predicated region
        $region13: #{tpu_custom_call.1} parent=11 // pred_check
          %p309 = pneg %p161
        $region14: #{tpu_custom_call.1} parent=11 // pred_check_branch
          %311 = sbr.rel (%p309) target = $region16
        $region15: #{tpu_custom_call.1} parent=11 // pred_region
          _
        $region16: #{tpu_custom_call.1} parent=11 // pred_fallthru
          _
        // Predicated region
        $region17: #{tpu_custom_call.1} parent=11 // pred_check
          %p312 = pneg %p182
        $region18: #{tpu_custom_call.1} parent=11 // pred_check_branch
          %314 = sbr.rel (%p312) target = $region20
        $region19: #{tpu_custom_call.1} parent=11 // pred_region
          _
        $region20: #{tpu_custom_call.1} parent=11 // pred_fallthru
          _
        // Predicated region
        $region21: #{tpu_custom_call.1} parent=11 // pred_check
          %p315 = pneg %p203
        $region22: #{tpu_custom_call.1} parent=11 // pred_check_branch
          %317 = sbr.rel (%p315) target = $region24
        $region23: #{tpu_custom_call.1} parent=11 // pred_region
          _
        $region24: #{tpu_custom_call.1} parent=11 // pred_fallthru
          _
        // Predicated region
        $region25: #{tpu_custom_call.1} parent=11 // pred_check
          %p318 = pneg %p224
        $region26: #{tpu_custom_call.1} parent=11 // pred_check_branch
          %320 = sbr.rel (%p318) target = $region28
        $region27: #{tpu_custom_call.1} parent=11 // pred_region
          _
        $region28: #{tpu_custom_call.1} parent=11 // pred_fallthru
          _
        // Predicated region
        $region29: #{tpu_custom_call.1} parent=11 // pred_check
          %p321 = pneg %p245
        $region30: #{tpu_custom_call.1} parent=11 // pred_check_branch
          %323 = sbr.rel (%p321) target = $region32
        $region31: #{tpu_custom_call.1} parent=11 // pred_region
          _
        $region32: #{tpu_custom_call.1} parent=11 // pred_fallthru
          _
        // Predicated region
        $region33: #{tpu_custom_call.1} parent=11 // pred_check
          %p324 = pneg %p266
        $region34: #{tpu_custom_call.1} parent=11 // pred_check_branch
          %326 = sbr.rel (%p324) target = $region36
        $region35: #{tpu_custom_call.1} parent=11 // pred_region
          %s328 = ssub.s32 16, 16
          %329 = vsyncadd [#allocation4], %s328
          %s331 = sshll.u32 %s9, 4
          %s332 = int_to_ptr.vmem [resolvable:$true] %s331
          %334 = dma.vmem_to_smem %s332, 16, [#allocation2], [#allocation4]
        $region36: #{tpu_custom_call.1} parent=11 // pred_fallthru
          _
      $region12: #{tpu_custom_call.1} parent=5 // pred_fallthru
        _
      %p335 = scmp.lt.s32.totalorder %s20, 2
      // Predicated region
      $region37: #{tpu_custom_call.1} parent=5 // pred_check
        %p336 = pneg %p335
      $region38: #{tpu_custom_call.1} parent=5 // pred_check_branch
        %338 = sbr.rel (%p336) target = $region40
      $region39: #{tpu_custom_call.1} parent=5 // pred_region
        // Predicated region
        $region41: #{tpu_custom_call.1} parent=39 // pred_check
          %p339 = pneg %p54
        $region42: #{tpu_custom_call.1} parent=39 // pred_check_branch
          %341 = sbr.rel (%p339) target = $region44
        $region43: #{tpu_custom_call.1} parent=39 // pred_region
          %s342 = smul.u32 2, %s28
          %p343 = scmp.lt.s32.totalorder %s27, 1
          %s344 = scalar_select %p343, %s27, 1
          %p345 = scmp.lt.s32.totalorder %s342, 1
          %s346 = scalar_select %p345, %s342, 1
          %s347 = smul.addr %s344, 2
          %s348 = sadd.s32 %s346, %s347
          %s349 = smul.addr %s348, 8
          %s350 = scalar_lea.vmem %s0, %s349
          %s351 = smul.u32 2, %s28
        $region44: #{tpu_custom_call.1} parent=39 // pred_fallthru
          _
        // Predicated region
        $region45: #{tpu_custom_call.1} parent=39 // pred_check
          %p352 = pneg %p82
        $region46: #{tpu_custom_call.1} parent=39 // pred_check_branch
          %354 = sbr.rel (%p352) target = $region48
        $region47: #{tpu_custom_call.1} parent=39 // pred_region
          %s355 = smul.u32 2, %s28
          %p356 = scmp.lt.s32.totalorder %s27, 1
          %s357 = scalar_select %p356, %s27, 1
          %p358 = scmp.lt.s32.totalorder %s355, 1
          %s359 = scalar_select %p358, %s355, 1
          %s360 = smul.addr %s357, 2
          %s361 = sadd.s32 %s359, %s360
          %s362 = smul.addr %s361, 8
          %s363 = scalar_lea.vmem %s1, %s362
          %s364 = smul.u32 2, %s28
        $region48: #{tpu_custom_call.1} parent=39 // pred_fallthru
          _
        // Predicated region
        $region49: #{tpu_custom_call.1} parent=39 // pred_check
          %p365 = pneg %p108
        $region50: #{tpu_custom_call.1} parent=39 // pred_check_branch
          %367 = sbr.rel (%p365) target = $region52
        $region51: #{tpu_custom_call.1} parent=39 // pred_region
          %p368 = scmp.lt.s32.totalorder %s27, 1
          %s369 = scalar_select %p368, %s27, 1
          %s370 = smul.addr %s369, 8
          %s371 = scalar_lea.vmem %s2, %s370
        $region52: #{tpu_custom_call.1} parent=39 // pred_fallthru
          _
        // Predicated region
        $region53: #{tpu_custom_call.1} parent=39 // pred_check
          %p372 = pneg %p134
        $region54: #{tpu_custom_call.1} parent=39 // pred_check_branch
          %374 = sbr.rel (%p372) target = $region56
        $region55: #{tpu_custom_call.1} parent=39 // pred_region
          %p375 = scmp.lt.s32.totalorder %s27, 1
          %s376 = scalar_select %p375, %s27, 1
          %s377 = smul.addr %s376, 4
          %s378 = scalar_lea.vmem %s3, %s377
        $region56: #{tpu_custom_call.1} parent=39 // pred_fallthru
          _
      $region40: #{tpu_custom_call.1} parent=5 // pred_fallthru
        _
      %p379 = scmp.le.s32.totalorder 1, %s20
      %p380 = scmp.lt.s32.totalorder %s20, 3
      %p381 = pnand %p379, %p380
      %p382 = pneg %p381
      // Predicated region
      $region57: #{tpu_custom_call.1} parent=5 // pred_check
        _
      $region58: #{tpu_custom_call.1} parent=5 // pred_check_branch
        %384 = sbr.rel (%p381) target = $region60
      $region59: #{tpu_custom_call.1} parent=5 // pred_region
        %s385 = ssub.s32 %s20, 1
        // Predicated region
        $region61: #{tpu_custom_call.1} parent=59 // pred_check
          %p386 = pneg %p266
        $region62: #{tpu_custom_call.1} parent=59 // pred_check_branch
          %388 = sbr.rel (%p386) target = $region64
        $region63: #{tpu_custom_call.1} parent=59 // pred_region
          %389 = dma.done [#allocation4], 16
        $region64: #{tpu_custom_call.1} parent=59 // pred_fallthru
          _
        %390 = sfence
        %s391 = smul.u32 2, %s30
        %p392 = scmp.lt.s32.totalorder %s29, 1
        %s393 = scalar_select %p392, %s29, 1
        %p394 = scmp.lt.s32.totalorder %s391, 1
        %s395 = scalar_select %p394, %s391, 1
        %s396 = smul.addr %s393, 2
        %s397 = sadd.s32 %s395, %s396
        %s398 = smul.addr %s397, 8
        %s399 = scalar_lea.vmem %s0, %s398
        %p400 = pneg %p60
        %p401 = pneg %p57
        %s402 = smul.u32 2, %s30
        %p403 = scmp.lt.s32.totalorder %s29, 1
        %s404 = scalar_select %p403, %s29, 1
        %p405 = scmp.lt.s32.totalorder %s402, 1
        %s406 = scalar_select %p405, %s402, 1
        %s407 = smul.addr %s404, 2
        %s408 = sadd.s32 %s406, %s407
        %s409 = smul.addr %s408, 8
        %s410 = scalar_lea.vmem %s1, %s409
        %p411 = pneg %p88
        %p412 = pneg %p85
        %p413 = scmp.lt.s32.totalorder %s29, 1
        %s414 = scalar_select %p413, %s29, 1
        %s415 = smul.addr %s414, 8
        %s416 = scalar_lea.vmem %s2, %s415
        %p417 = pneg %p114
        %p418 = pneg %p111
        %p419 = scmp.lt.s32.totalorder %s29, 1
        %s420 = scalar_select %p419, %s29, 1
        %s421 = smul.addr %s420, 4
        %s422 = scalar_lea.vmem %s3, %s421
        %p423 = pneg %p140
        %p424 = pneg %p137
        %p425 = pneg %p161
        %p426 = pneg %p158
        %p427 = pneg %p182
        %p428 = pneg %p179
        %p429 = pneg %p203
        %p430 = pneg %p200
        %p431 = pneg %p224
        %p432 = pneg %p221
        %p433 = pneg %p245
        %p434 = pneg %p242
        %p435 = pneg %p266
        %p436 = pneg %p263
        %p437 = pneg %p294
        %p438 = pneg %p291
        %s439 = sand.u32 %s281, 1
        %s440 = scalar_lea.sflag [#allocation3], %s439
        %s441 = sand.u32 %s281, 1
        %s442 = smul.addr %s441, 16
        %s443 = scalar_lea.vmem [#allocation5], %s442
        %s444 = smul.u32 2, %s30
        %p445 = scmp.lt.s32.totalorder %s29, 1
        %s446 = scalar_select %p445, %s29, 1
        %p447 = scmp.lt.s32.totalorder %s444, 1
        %s448 = scalar_select %p447, %s444, 1
        %s449 = smul.addr %s446, 2
        %s450 = sadd.s32 %s448, %s449
        %s451 = smul.addr %s450, 8
        %s452 = scalar_lea.vmem %s0, %s451
        %s453 = smul.u32 2, %s30
        %s454 = smul.u32 2, %s30
        %p455 = scmp.lt.s32.totalorder %s29, 1
        %s456 = scalar_select %p455, %s29, 1
        %p457 = scmp.lt.s32.totalorder %s454, 1
        %s458 = scalar_select %p457, %s454, 1
        %s459 = smul.addr %s456, 2
        %s460 = sadd.s32 %s458, %s459
        %s461 = smul.addr %s460, 8
        %s462 = scalar_lea.vmem %s1, %s461
        %s463 = smul.u32 2, %s30
        %p464 = scmp.lt.s32.totalorder %s29, 1
        %s465 = scalar_select %p464, %s29, 1
        %s466 = smul.addr %s465, 8
        %s467 = scalar_lea.vmem %s2, %s466
        %p468 = scmp.lt.s32.totalorder %s29, 1
        %s469 = scalar_select %p468, %s29, 1
        %s470 = smul.addr %s469, 4
        %s471 = scalar_lea.vmem %s3, %s470
        %s472 = smul.u32 2, %s30
        %v473 = vld [vmem:[%s452] sm:$0xff]
        %v474 = vld [vmem:[%s452 + $0x8] sm:$0xff]
        %v475 = vld [vmem:[%s462] sm:$0xff]
        %v476 = vld [vmem:[%s462 + $0x8] sm:$0xff]
        %v477 = vld [vmem:[%s467] sm:$0xff]
        %v478 = vld [vmem:[%s471] sm:$0x7]
        %v479 = vld [vmem:[%s4] sm:$0xff]
        %v480 = vld [vmem:[%s4 + $0x8] sm:$0xff]
        %v481 = vld [vmem:[%s4 + $0x10] sm:$0xff]
        %v482 = vld [vmem:[%s4 + $0x18] sm:$0xff]
        %vm483 = vcmask 261120
        %v485 = vsel %vm483, %v473, 0
        %v488 = vsel %vm483, %v474, 0
        %v491 = vsel %vm483, %v479, 0
        %v494 = vsel %vm483, %v480, 0
        %v497 = vsel %vm483, %v481, 0
        %v500 = vsel %vm483, %v482, 0
        %502 = vmatprep.subr.mxu0 0.0
        %503 = vmatpush1.xpose.msra.mxu0 %v491
        %504 = vmatprep.subr.mxu0 0.0
        %505 = vmatpush1.xpose.msra.mxu0 %v494
        %506 = vmatprep.subr.mxu0 0.0
        %507 = vmatpush1.xpose.msra.mxu0 %v497
        %508 = vmatprep.subr.mxu0 0.0
        %509 = vmatpush1.xpose.msra.mxu0 %v500
        %510 = vmatprep.subr.mxu0 0.0
        %511 = vmatpush1.xpose.msra.mxu0 0.0
        %512 = vmatprep.subr.mxu0 0.0
        %513 = vmatpush1.xpose.msra.mxu0 0.0
        %514 = vmatprep.subr.mxu0 0.0
        %515 = vmatpush1.xpose.msra.mxu0 0.0
        %516 = vmatprep.subr.mxu0 0.0
        %517 = vmatpush1.xpose.msra.mxu0 0.0
        %518 = vmatprep.subr.mxu0 0.0
        %519 = vmatpush1.xpose.msra.mxu0 0.0
        %520 = vmatprep.subr.mxu0 0.0
        %521 = vmatpush1.xpose.msra.mxu0 0.0
        %522 = vmatprep.subr.mxu0 0.0
        %523 = vmatpush1.xpose.msra.mxu0 0.0
        %524 = vmatprep.subr.mxu0 0.0
        %525 = vmatpush1.xpose.msra.mxu0 0.0
        %526 = vmatprep.subr.mxu0 0.0
        %527 = vmatpush1.xpose.msra.mxu0 0.0
        %528 = vmatprep.subr.mxu0 0.0
        %529 = vmatpush1.xpose.msra.mxu0 0.0
        %530 = vmatprep.subr.mxu0 0.0
        %531 = vmatpush1.xpose.msra.mxu0 0.0
        %532 = vmatprep.subr.mxu0 0.0
        %533 = vmatpush1.xpose.msra.mxu0 0.0
        %534 = vmatprep.subr.mxu0 0.0
        %535 = vmatpush1.xpose.msra.mxu0 0.0
        %536 = vmatprep.subr.mxu0 0.0
        %537 = vmatpush1.xpose.msra.mxu0 0.0
        %538 = vmatprep.subr.mxu0 0.0
        %539 = vmatpush1.xpose.msra.mxu0 0.0
        %540 = vmatprep.subr.mxu0 0.0
        %541 = vmatpush1.xpose.msra.mxu0 0.0
        %542 = vmatprep.subr.mxu0 0.0
        %543 = vmatpush1.xpose.msra.mxu0 0.0
        %544 = vmatprep.subr.mxu0 0.0
        %545 = vmatpush1.xpose.msra.mxu0 0.0
        %546 = vmatprep.subr.mxu0 0.0
        %547 = vmatpush1.xpose.msra.mxu0 0.0
        %548 = vmatprep.subr.mxu0 0.0
        %549 = vmatpush1.xpose.msra.mxu0 0.0
        %550 = vmatprep.subr.mxu0 0.0
        %551 = vmatpush1.xpose.msra.mxu0 0.0
        %552 = vmatprep.subr.mxu0 0.0
        %553 = vmatpush1.xpose.msra.mxu0 0.0
        %554 = vmatprep.subr.mxu0 0.0
        %555 = vmatpush1.xpose.msra.mxu0 0.0
        %556 = vmatprep.subr.mxu0 0.0
        %557 = vmatpush1.xpose.msra.mxu0 0.0
        %558 = vmatprep.subr.mxu0 0.0
        %559 = vmatpush1.xpose.msra.mxu0 0.0
        %560 = vmatprep.subr.mxu0 0.0
        %561 = vmatpush1.xpose.msra.mxu0 0.0
        %562 = vmatprep.subr.mxu0 0.0
        %563 = vmatpush1.xpose.msra.mxu0 0.0
        %564 = vmatprep.subr.mxu0 0.0
        %565 = vmatpush1.xpose.msra.mxu0 0.0
        %566 = vmatprep.mubr.f32.mxu0 0.0
        %567 = vmatmul.mubr.f32.gmra.mrb[0].mxu0 %v485
        %v568 = vpop.f32.mrb[0].mxu0
        %v569 = vadd.f32 0.0, %v568
        %v570 = vpop.f32.mrb[0].mxu0
        %571 = vmatprep.mubr.f32.mxu0 0.0
        %572 = vmatmul.mubr.f32.gmra.mrb[0].mxu0 %v488
        %v573 = vpop.f32.mrb[0].mxu0
        %v574 = vadd.f32 0.0, %v573
        %v575 = vpop.f32.mrb[0].mxu0
        %576 = vdwg.mxu0
        %v577 = vld [vmem:[%s5] sm:$0xff]
        %v578 = vld [vmem:[%s5 + $0x8] sm:$0xff]
        %v579 = vld [vmem:[%s5 + $0x10] sm:$0xff]
        %v580 = vld [vmem:[%s5 + $0x18] sm:$0xff]
        %vm581 = vcmask 64512
        %v583 = vsel %vm581, %v577, 0
        %v586 = vsel %vm581, %v578, 0
        %v589 = vsel %vm581, %v579, 0
        %v592 = vsel %vm581, %v580, 0
        %v595 = vsel %vm581, %v477, 0
        %597 = vmatprep.subr.mxu0 0.0
        %598 = vmatpush1.xpose.msra.mxu0 %v595
        %599 = vmatprep.subr.mxu0 0.0
        %600 = vmatpush1.xpose.msra.mxu0 0.0
        %601 = vmatprep.subr.mxu0 0.0
        %602 = vmatpush1.xpose.msra.mxu0 0.0
        %603 = vmatprep.subr.mxu0 0.0
        %604 = vmatpush1.xpose.msra.mxu0 0.0
        %605 = vmatprep.subr.mxu0 0.0
        %606 = vmatpush1.xpose.msra.mxu0 0.0
        %607 = vmatprep.subr.mxu0 0.0
        %608 = vmatpush1.xpose.msra.mxu0 0.0
        %609 = vmatprep.subr.mxu0 0.0
        %610 = vmatpush1.xpose.msra.mxu0 0.0
        %611 = vmatprep.subr.mxu0 0.0
        %612 = vmatpush1.xpose.msra.mxu0 0.0
        %613 = vmatprep.subr.mxu0 0.0
        %614 = vmatpush1.xpose.msra.mxu0 0.0
        %615 = vmatprep.subr.mxu0 0.0
        %616 = vmatpush1.xpose.msra.mxu0 0.0
        %617 = vmatprep.subr.mxu0 0.0
        %618 = vmatpush1.xpose.msra.mxu0 0.0
        %619 = vmatprep.subr.mxu0 0.0
        %620 = vmatpush1.xpose.msra.mxu0 0.0
        %621 = vmatprep.subr.mxu0 0.0
        %622 = vmatpush1.xpose.msra.mxu0 0.0
        %623 = vmatprep.subr.mxu0 0.0
        %624 = vmatpush1.xpose.msra.mxu0 0.0
        %625 = vmatprep.subr.mxu0 0.0
        %626 = vmatpush1.xpose.msra.mxu0 0.0
        %627 = vmatprep.subr.mxu0 0.0
        %628 = vmatpush1.xpose.msra.mxu0 0.0
        %629 = vmatprep.subr.mxu0 0.0
        %630 = vmatpush1.xpose.msra.mxu0 0.0
        %631 = vmatprep.subr.mxu0 0.0
        %632 = vmatpush1.xpose.msra.mxu0 0.0
        %633 = vmatprep.subr.mxu0 0.0
        %634 = vmatpush1.xpose.msra.mxu0 0.0
        %635 = vmatprep.subr.mxu0 0.0
        %636 = vmatpush1.xpose.msra.mxu0 0.0
        %637 = vmatprep.subr.mxu0 0.0
        %638 = vmatpush1.xpose.msra.mxu0 0.0
        %639 = vmatprep.subr.mxu0 0.0
        %640 = vmatpush1.xpose.msra.mxu0 0.0
        %641 = vmatprep.subr.mxu0 0.0
        %642 = vmatpush1.xpose.msra.mxu0 0.0
        %643 = vmatprep.subr.mxu0 0.0
        %644 = vmatpush1.xpose.msra.mxu0 0.0
        %645 = vmatprep.subr.mxu0 0.0
        %646 = vmatpush1.xpose.msra.mxu0 0.0
        %647 = vmatprep.subr.mxu0 0.0
        %648 = vmatpush1.xpose.msra.mxu0 0.0
        %649 = vmatprep.subr.mxu0 0.0
        %650 = vmatpush1.xpose.msra.mxu0 0.0
        %651 = vmatprep.subr.mxu0 0.0
        %652 = vmatpush1.xpose.msra.mxu0 0.0
        %653 = vmatprep.subr.mxu0 0.0
        %654 = vmatpush1.xpose.msra.mxu0 0.0
        %655 = vmatprep.subr.mxu0 0.0
        %656 = vmatpush1.xpose.msra.mxu0 0.0
        %657 = vmatprep.subr.mxu0 0.0
        %658 = vmatpush1.xpose.msra.mxu0 0.0
        %659 = vmatprep.subr.mxu0 0.0
        %660 = vmatpush1.xpose.msra.mxu0 0.0
        %661 = vmatprep.mubr.f32.mxu0 0.0
        %662 = vmatmul.mubr.f32.gmra.mrb[0].mxu0 %v583
        %v663 = vpop.f32.mrb[0].mxu0
        %v664 = vadd.f32 0.0, %v663
        %v665 = vpop.f32.mrb[0].mxu0
        %666 = vmatprep.mubr.f32.mxu0 0.0
        %667 = vmatmul.mubr.f32.gmra.mrb[0].mxu0 %v586
        %v668 = vpop.f32.mrb[0].mxu0
        %v669 = vadd.f32 0.0, %v668
        %v670 = vpop.f32.mrb[0].mxu0
        %671 = vmatprep.mubr.f32.mxu0 0.0
        %672 = vmatmul.mubr.f32.gmra.mrb[0].mxu0 %v589
        %v673 = vpop.f32.mrb[0].mxu0
        %v674 = vadd.f32 0.0, %v673
        %v675 = vpop.f32.mrb[0].mxu0
        %676 = vmatprep.mubr.f32.mxu0 0.0
        %677 = vmatmul.mubr.f32.gmra.mrb[0].mxu0 %v592
        %v678 = vpop.f32.mrb[0].mxu0
        %v679 = vadd.f32 0.0, %v678
        %v680 = vpop.f32.mrb[0].mxu0
        %681 = vdwg.mxu0
        %v682 = vld [vmem:[%s6] sm:$0xff]
        %v683 = vld [vmem:[%s6 + $0x8] sm:$0xff]
        %v684 = vld [vmem:[%s6 + $0x10] sm:$0xff]
        %v685 = vld [vmem:[%s6 + $0x18] sm:$0xff]
        %v687 = vsel %vm581, %v682, 0
        %v690 = vsel %vm581, %v683, 0
        %v693 = vsel %vm581, %v684, 0
        %v696 = vsel %vm581, %v685, 0
        %698 = vmatprep.subr.mxu0 0.0
        %699 = vmatpush1.xpose.msra.mxu0 %v687
        %700 = vmatprep.subr.mxu0 0.0
        %701 = vmatpush1.xpose.msra.mxu0 %v690
        %702 = vmatprep.subr.mxu0 0.0
        %703 = vmatpush1.xpose.msra.mxu0 %v693
        %704 = vmatprep.subr.mxu0 0.0
        %705 = vmatpush1.xpose.msra.mxu0 %v696
        %706 = vmatprep.subr.mxu0 0.0
        %707 = vmatpush1.xpose.msra.mxu0 0.0
        %708 = vmatprep.subr.mxu0 0.0
        %709 = vmatpush1.xpose.msra.mxu0 0.0
        %710 = vmatprep.subr.mxu0 0.0
        %711 = vmatpush1.xpose.msra.mxu0 0.0
        %712 = vmatprep.subr.mxu0 0.0
        %713 = vmatpush1.xpose.msra.mxu0 0.0
        %714 = vmatprep.subr.mxu0 0.0
        %715 = vmatpush1.xpose.msra.mxu0 0.0
        %716 = vmatprep.subr.mxu0 0.0
        %717 = vmatpush1.xpose.msra.mxu0 0.0
        %718 = vmatprep.subr.mxu0 0.0
        %719 = vmatpush1.xpose.msra.mxu0 0.0
        %720 = vmatprep.subr.mxu0 0.0
        %721 = vmatpush1.xpose.msra.mxu0 0.0
        %722 = vmatprep.subr.mxu0 0.0
        %723 = vmatpush1.xpose.msra.mxu0 0.0
        %724 = vmatprep.subr.mxu0 0.0
        %725 = vmatpush1.xpose.msra.mxu0 0.0
        %726 = vmatprep.subr.mxu0 0.0
        %727 = vmatpush1.xpose.msra.mxu0 0.0
        %728 = vmatprep.subr.mxu0 0.0
        %729 = vmatpush1.xpose.msra.mxu0 0.0
        %730 = vmatprep.subr.mxu0 0.0
        %731 = vmatpush1.xpose.msra.mxu0 0.0
        %732 = vmatprep.subr.mxu0 0.0
        %733 = vmatpush1.xpose.msra.mxu0 0.0
        %734 = vmatprep.subr.mxu0 0.0
        %735 = vmatpush1.xpose.msra.mxu0 0.0
        %736 = vmatprep.subr.mxu0 0.0
        %737 = vmatpush1.xpose.msra.mxu0 0.0
        %738 = vmatprep.subr.mxu0 0.0
        %739 = vmatpush1.xpose.msra.mxu0 0.0
        %740 = vmatprep.subr.mxu0 0.0
        %741 = vmatpush1.xpose.msra.mxu0 0.0
        %742 = vmatprep.subr.mxu0 0.0
        %743 = vmatpush1.xpose.msra.mxu0 0.0
        %744 = vmatprep.subr.mxu0 0.0
        %745 = vmatpush1.xpose.msra.mxu0 0.0
        %746 = vmatprep.subr.mxu0 0.0
        %747 = vmatpush1.xpose.msra.mxu0 0.0
        %748 = vmatprep.subr.mxu0 0.0
        %749 = vmatpush1.xpose.msra.mxu0 0.0
        %750 = vmatprep.subr.mxu0 0.0
        %751 = vmatpush1.xpose.msra.mxu0 0.0
        %752 = vmatprep.subr.mxu0 0.0
        %753 = vmatpush1.xpose.msra.mxu0 0.0
        %754 = vmatprep.subr.mxu0 0.0
        %755 = vmatpush1.xpose.msra.mxu0 0.0
        %756 = vmatprep.subr.mxu0 0.0
        %757 = vmatpush1.xpose.msra.mxu0 0.0
        %758 = vmatprep.subr.mxu0 0.0
        %759 = vmatpush1.xpose.msra.mxu0 0.0
        %760 = vmatprep.subr.mxu0 0.0
        %761 = vmatpush1.xpose.msra.mxu0 0.0
        %762 = vmatprep.mubr.f32.mxu0 0.0
        %763 = vmatmul.mubr.f32.gmra.mrb[0].mxu0 %v595
        %v764 = vpop.f32.mrb[0].mxu0
        %v765 = vadd.f32 0.0, %v764
        %v766 = vpop.f32.mrb[0].mxu0
        %767 = vdwg.mxu0
        %v768 = vsel %vm483, %v569, -inf
        %v769 = vsel %vm483, %v574, -inf
        %v770 = vmax.f32 %v768, %v769
        %771 = vmax.xlane.f32.xlu0 %v770
        %v772 = vpop.xlane.xlu0 %771
        %v773 = vrot.slane %v772, 4
        %v774 = vmax.f32 %v772, %v773
        %v775 = vrot.slane %v774, 2
        %v776 = vmax.f32 %v774, %v775
        %v777 = vrot.slane %v776, 1
        %v778 = vmax.f32 %v776, %v777
        %s779 = vtos %v778
        %v780 = vsel %vm581, %v664, -inf
        %v781 = vsel %vm581, %v669, -inf
        %v782 = vsel %vm581, %v674, -inf
        %v783 = vsel %vm581, %v679, -inf
        %v784 = vmax.f32 %v780, %v781
        %v785 = vmax.f32 %v782, %v783
        %v786 = vmax.f32 %v784, %v785
        %787 = vmax.xlane.f32.xlu0 %v786
        %v788 = vpop.xlane.xlu0 %787
        %v789 = vrot.slane %v788, 4
        %v790 = vmax.f32 %v788, %v789
        %v791 = vrot.slane %v790, 2
        %v792 = vmax.f32 %v790, %v791
        %v793 = vrot.slane %v792, 1
        %v794 = vmax.f32 %v792, %v793
        %s795 = vtos %v794
        %s796 = smax.f32 %s779, %s795
        %v797 = vsel %vm483, %v569, inf
        %v798 = vsel %vm483, %v574, inf
        %v799 = vmin.f32 %v797, %v798
        %800 = vmin.xlane.f32.xlu0 %v799
        %v801 = vpop.xlane.xlu0 %800
        %v802 = vrot.slane %v801, 4
        %v803 = vmin.f32 %v801, %v802
        %v804 = vrot.slane %v803, 2
        %v805 = vmin.f32 %v803, %v804
        %v806 = vrot.slane %v805, 1
        %v807 = vmin.f32 %v805, %v806
        %s808 = vtos %v807
        %v809 = vsel %vm581, %v664, inf
        %v810 = vsel %vm581, %v669, inf
        %v811 = vsel %vm581, %v674, inf
        %v812 = vsel %vm581, %v679, inf
        %v813 = vmin.f32 %v809, %v810
        %v814 = vmin.f32 %v811, %v812
        %v815 = vmin.f32 %v813, %v814
        %816 = vmin.xlane.f32.xlu0 %v815
        %v817 = vpop.xlane.xlu0 %816
        %v818 = vrot.slane %v817, 4
        %v819 = vmin.f32 %v817, %v818
        %v820 = vrot.slane %v819, 2
        %v821 = vmin.f32 %v819, %v820
        %v822 = vrot.slane %v821, 1
        %v823 = vmin.f32 %v821, %v822
        %s824 = vtos %v823
        %s825 = smin.f32 %s808, %s824
        %s826 = sadd.f32 %s796, %s825
        %s827 = smul.f32 %s826, 0.5
        %v828 = vstv %s827
        %v829 = vsub.f32 %v569, %v828
        %v830 = vsub.f32 %v574, %v828
        %v831 = vmax.f32 %v829, -87.0
        %v832 = vmax.f32 %v830, -87.0
        %v833 = vmin.f32 %v831, 87.0
        %v834 = vmin.f32 %v832, 87.0
        %v835 = vsub.f32 %v664, %v828
        %v836 = vsub.f32 %v669, %v828
        %v837 = vsub.f32 %v674, %v828
        %v838 = vsub.f32 %v679, %v828
        %v839 = vmax.f32 %v835, -87.0
        %v840 = vmax.f32 %v836, -87.0
        %v841 = vmax.f32 %v837, -87.0
        %v842 = vmax.f32 %v838, -87.0
        %v843 = vmin.f32 %v839, 87.0
        %v844 = vmin.f32 %v840, 87.0
        %v845 = vmin.f32 %v841, 87.0
        %v846 = vmin.f32 %v842, 87.0
        %v847 = vmul.f32 %v833, 1.442695
        %v848 = vpow.pop %v847
        %v849 = vmul.f32 %v834, 1.442695
        %v850 = vpow.pop %v849
        %v851 = vsub.f32 0.0, %v833
        %v852 = vsub.f32 0.0, %v834
        %v853 = vmul.f32 %v851, 1.442695
        %v854 = vpow.pop %v853
        %v855 = vmul.f32 %v852, 1.442695
        %v856 = vpow.pop %v855
        %v857 = vmul.f32 %v843, 1.442695
        %v858 = vpow.pop %v857
        %v859 = vmul.f32 %v844, 1.442695
        %v860 = vpow.pop %v859
        %v861 = vmul.f32 %v845, 1.442695
        %v862 = vpow.pop %v861
        %v863 = vmul.f32 %v846, 1.442695
        %v864 = vpow.pop %v863
        %v865 = vsub.f32 0.0, %v843
        %v866 = vsub.f32 0.0, %v844
        %v867 = vsub.f32 0.0, %v845
        %v868 = vsub.f32 0.0, %v846
        %v869 = vmul.f32 %v865, 1.442695
        %v870 = vpow.pop %v869
        %v871 = vmul.f32 %v866, 1.442695
        %v872 = vpow.pop %v871
        %v873 = vmul.f32 %v867, 1.442695
        %v874 = vpow.pop %v873
        %v875 = vmul.f32 %v868, 1.442695
        %v876 = vpow.pop %v875
        %878 = vset.pattern.permute.xlu0 0
        %879 = vperm.xlu0 %878, %v848
        %v880 = vpop.permute.xlu0 %879
        %883 = vset.pattern.permute.xlu0 0
        %884 = vperm.xlu0 %883, %v850
        %v885 = vpop.permute.xlu0 %884
        %v887 = vlaneseq
        %v888 = vshrl.u32 %v887, 7
        %v889 = vsub.s32 0, %v888
        %v890 = vrot.slane %v870, %v889
        %v891 = vmul.f32 %v880, %v890
        %v892 = vmul.f32 %v885, %v890
        %894 = vset.pattern.permute.xlu0 0
        %895 = vperm.xlu0 %894, %v854
        %v896 = vpop.permute.xlu0 %895
        %899 = vset.pattern.permute.xlu0 0
        %900 = vperm.xlu0 %899, %v856
        %v901 = vpop.permute.xlu0 %900
        %v903 = vlaneseq
        %v904 = vshrl.u32 %v903, 7
        %v905 = vsub.s32 0, %v904
        %v906 = vrot.slane %v858, %v905
        %v907 = vmul.f32 %v896, %v906
        %v908 = vmul.f32 %v901, %v906
        %v909 = vmin.f32 %v891, %v907
        %v910 = vmin.f32 %v892, %v908
        %v911 = vadd.f32 %v909, 0.0
        %v912 = vadd.f32 %v910, 0.0
        %913 = vset.pattern.permute.xlu0 1
        %914 = vperm.xlu0 %913, %v848
        %v915 = vpop.permute.xlu0 %914
        %917 = vset.pattern.permute.xlu0 1
        %918 = vperm.xlu0 %917, %v850
        %v919 = vpop.permute.xlu0 %918
        %v921 = vlaneseq
        %v922 = vshrl.u32 %v921, 7
        %v923 = vsub.s32 1, %v922
        %v924 = vrot.slane %v870, %v923
        %v925 = vmul.f32 %v915, %v924
        %v926 = vmul.f32 %v919, %v924
        %927 = vset.pattern.permute.xlu0 1
        %928 = vperm.xlu0 %927, %v854
        %v929 = vpop.permute.xlu0 %928
        %931 = vset.pattern.permute.xlu0 1
        %932 = vperm.xlu0 %931, %v856
        %v933 = vpop.permute.xlu0 %932
        %v935 = vlaneseq
        %v936 = vshrl.u32 %v935, 7
        %v937 = vsub.s32 1, %v936
        %v938 = vrot.slane %v858, %v937
        %v939 = vmul.f32 %v929, %v938
        %v940 = vmul.f32 %v933, %v938
        %v941 = vmin.f32 %v925, %v939
        %v942 = vmin.f32 %v926, %v940
        %v943 = vadd.f32 %v911, %v941
        %v944 = vadd.f32 %v912, %v942
        %945 = vset.pattern.permute.xlu0 2
        %946 = vperm.xlu0 %945, %v848
        %v947 = vpop.permute.xlu0 %946
        %949 = vset.pattern.permute.xlu0 2
        %950 = vperm.xlu0 %949, %v850
        %v951 = vpop.permute.xlu0 %950
        %v953 = vlaneseq
        %v954 = vshrl.u32 %v953, 7
        %v955 = vsub.s32 2, %v954
        %v956 = vrot.slane %v870, %v955
        %v957 = vmul.f32 %v947, %v956
        %v958 = vmul.f32 %v951, %v956
        %959 = vset.pattern.permute.xlu0 2
        %960 = vperm.xlu0 %959, %v854
        %v961 = vpop.permute.xlu0 %960
        %963 = vset.pattern.permute.xlu0 2
        %964 = vperm.xlu0 %963, %v856
        %v965 = vpop.permute.xlu0 %964
        %v967 = vlaneseq
        %v968 = vshrl.u32 %v967, 7
        %v969 = vsub.s32 2, %v968
        %v970 = vrot.slane %v858, %v969
        %v971 = vmul.f32 %v961, %v970
        %v972 = vmul.f32 %v965, %v970
        %v973 = vmin.f32 %v957, %v971
        %v974 = vmin.f32 %v958, %v972
        %v975 = vadd.f32 %v943, %v973
        %v976 = vadd.f32 %v944, %v974
        %977 = vset.pattern.permute.xlu0 3
        %978 = vperm.xlu0 %977, %v848
        %v979 = vpop.permute.xlu0 %978
        %981 = vset.pattern.permute.xlu0 3
        %982 = vperm.xlu0 %981, %v850
        %v983 = vpop.permute.xlu0 %982
        %v985 = vlaneseq
        %v986 = vshrl.u32 %v985, 7
        %v987 = vsub.s32 3, %v986
        %v988 = vrot.slane %v870, %v987
        %v989 = vmul.f32 %v979, %v988
        %v990 = vmul.f32 %v983, %v988
        %991 = vset.pattern.permute.xlu0 3
        %992 = vperm.xlu0 %991, %v854
        %v993 = vpop.permute.xlu0 %992
        %995 = vset.pattern.permute.xlu0 3
        %996 = vperm.xlu0 %995, %v856
        %v997 = vpop.permute.xlu0 %996
        %v999 = vlaneseq
        %v1000 = vshrl.u32 %v999, 7
        %v1001 = vsub.s32 3, %v1000
        %v1002 = vrot.slane %v858, %v1001
        %v1003 = vmul.f32 %v993, %v1002
        %v1004 = vmul.f32 %v997, %v1002
        %v1005 = vmin.f32 %v989, %v1003
        %v1006 = vmin.f32 %v990, %v1004
        %v1007 = vadd.f32 %v975, %v1005
        %v1008 = vadd.f32 %v976, %v1006
        %1009 = vset.pattern.permute.xlu0 4
        %1010 = vperm.xlu0 %1009, %v848
        %v1011 = vpop.permute.xlu0 %1010
        %1013 = vset.pattern.permute.xlu0 4
        %1014 = vperm.xlu0 %1013, %v850
        %v1015 = vpop.permute.xlu0 %1014
        %v1017 = vlaneseq
        %v1018 = vshrl.u32 %v1017, 7
        %v1019 = vsub.s32 4, %v1018
        %v1020 = vrot.slane %v870, %v1019
        %v1021 = vmul.f32 %v1011, %v1020
        %v1022 = vmul.f32 %v1015, %v1020
        %1023 = vset.pattern.permute.xlu0 4
        %1024 = vperm.xlu0 %1023, %v854
        %v1025 = vpop.permute.xlu0 %1024
        %1027 = vset.pattern.permute.xlu0 4
        %1028 = vperm.xlu0 %1027, %v856
        %v1029 = vpop.permute.xlu0 %1028
        %v1031 = vlaneseq
        %v1032 = vshrl.u32 %v1031, 7
        %v1033 = vsub.s32 4, %v1032
        %v1034 = vrot.slane %v858, %v1033
        %v1035 = vmul.f32 %v1025, %v1034
        %v1036 = vmul.f32 %v1029, %v1034
        %v1037 = vmin.f32 %v1021, %v1035
        %v1038 = vmin.f32 %v1022, %v1036
        %v1039 = vadd.f32 %v1007, %v1037
        %v1040 = vadd.f32 %v1008, %v1038
        %1041 = vset.pattern.permute.xlu0 5
        %1042 = vperm.xlu0 %1041, %v848
        %v1043 = vpop.permute.xlu0 %1042
        %1045 = vset.pattern.permute.xlu0 5
        %1046 = vperm.xlu0 %1045, %v850
        %v1047 = vpop.permute.xlu0 %1046
        %v1049 = vlaneseq
        %v1050 = vshrl.u32 %v1049, 7
        %v1051 = vsub.s32 5, %v1050
        %v1052 = vrot.slane %v870, %v1051
        %v1053 = vmul.f32 %v1043, %v1052
        %v1054 = vmul.f32 %v1047, %v1052
        %1055 = vset.pattern.permute.xlu0 5
        %1056 = vperm.xlu0 %1055, %v854
        %v1057 = vpop.permute.xlu0 %1056
        %1059 = vset.pattern.permute.xlu0 5
        %1060 = vperm.xlu0 %1059, %v856
        %v1061 = vpop.permute.xlu0 %1060
        %v1063 = vlaneseq
        %v1064 = vshrl.u32 %v1063, 7
        %v1065 = vsub.s32 5, %v1064
        %v1066 = vrot.slane %v858, %v1065
        %v1067 = vmul.f32 %v1057, %v1066
        %v1068 = vmul.f32 %v1061, %v1066
        %v1069 = vmin.f32 %v1053, %v1067
        %v1070 = vmin.f32 %v1054, %v1068
        %v1071 = vadd.f32 %v1039, %v1069
        %v1072 = vadd.f32 %v1040, %v1070
        %1073 = vset.pattern.permute.xlu0 6
        %1074 = vperm.xlu0 %1073, %v848
        %v1075 = vpop.permute.xlu0 %1074
        %1077 = vset.pattern.permute.xlu0 6
        %1078 = vperm.xlu0 %1077, %v850
        %v1079 = vpop.permute.xlu0 %1078
        %v1081 = vlaneseq
        %v1082 = vshrl.u32 %v1081, 7
        %v1083 = vsub.s32 6, %v1082
        %v1084 = vrot.slane %v870, %v1083
        %v1085 = vmul.f32 %v1075, %v1084
        %v1086 = vmul.f32 %v1079, %v1084
        %1087 = vset.pattern.permute.xlu0 6
        %1088 = vperm.xlu0 %1087, %v854
        %v1089 = vpop.permute.xlu0 %1088
        %1091 = vset.pattern.permute.xlu0 6
        %1092 = vperm.xlu0 %1091, %v856
        %v1093 = vpop.permute.xlu0 %1092
        %v1095 = vlaneseq
        %v1096 = vshrl.u32 %v1095, 7
        %v1097 = vsub.s32 6, %v1096
        %v1098 = vrot.slane %v858, %v1097
        %v1099 = vmul.f32 %v1089, %v1098
        %v1100 = vmul.f32 %v1093, %v1098
        %v1101 = vmin.f32 %v1085, %v1099
        %v1102 = vmin.f32 %v1086, %v1100
        %v1103 = vadd.f32 %v1071, %v1101
        %v1104 = vadd.f32 %v1072, %v1102
        %1105 = vset.pattern.permute.xlu0 7
        %1106 = vperm.xlu0 %1105, %v848
        %v1107 = vpop.permute.xlu0 %1106
        %1109 = vset.pattern.permute.xlu0 7
        %1110 = vperm.xlu0 %1109, %v850
        %v1111 = vpop.permute.xlu0 %1110
        %v1113 = vlaneseq
        %v1114 = vshrl.u32 %v1113, 7
        %v1115 = vsub.s32 7, %v1114
        %v1116 = vrot.slane %v870, %v1115
        %v1117 = vmul.f32 %v1107, %v1116
        %v1118 = vmul.f32 %v1111, %v1116
        %1119 = vset.pattern.permute.xlu0 7
        %1120 = vperm.xlu0 %1119, %v854
        %v1121 = vpop.permute.xlu0 %1120
        %1123 = vset.pattern.permute.xlu0 7
        %1124 = vperm.xlu0 %1123, %v856
        %v1125 = vpop.permute.xlu0 %1124
        %v1127 = vlaneseq
        %v1128 = vshrl.u32 %v1127, 7
        %v1129 = vsub.s32 7, %v1128
        %v1130 = vrot.slane %v858, %v1129
        %v1131 = vmul.f32 %v1121, %v1130
        %v1132 = vmul.f32 %v1125, %v1130
        %v1133 = vmin.f32 %v1117, %v1131
        %v1134 = vmin.f32 %v1118, %v1132
        %v1135 = vadd.f32 %v1103, %v1133
        %v1136 = vadd.f32 %v1104, %v1134
        %1137 = vset.pattern.permute.xlu0 8
        %1138 = vperm.xlu0 %1137, %v848
        %v1139 = vpop.permute.xlu0 %1138
        %1141 = vset.pattern.permute.xlu0 8
        %1142 = vperm.xlu0 %1141, %v850
        %v1143 = vpop.permute.xlu0 %1142
        %v1145 = vlaneseq
        %v1146 = vshrl.u32 %v1145, 7
        %v1147 = vsub.s32 0, %v1146
        %v1148 = vrot.slane %v872, %v1147
        %v1149 = vmul.f32 %v1139, %v1148
        %v1150 = vmul.f32 %v1143, %v1148
        %1151 = vset.pattern.permute.xlu0 8
        %1152 = vperm.xlu0 %1151, %v854
        %v1153 = vpop.permute.xlu0 %1152
        %1155 = vset.pattern.permute.xlu0 8
        %1156 = vperm.xlu0 %1155, %v856
        %v1157 = vpop.permute.xlu0 %1156
        %v1159 = vlaneseq
        %v1160 = vshrl.u32 %v1159, 7
        %v1161 = vsub.s32 0, %v1160
        %v1162 = vrot.slane %v860, %v1161
        %v1163 = vmul.f32 %v1153, %v1162
        %v1164 = vmul.f32 %v1157, %v1162
        %v1165 = vmin.f32 %v1149, %v1163
        %v1166 = vmin.f32 %v1150, %v1164
        %v1167 = vadd.f32 %v1135, %v1165
        %v1168 = vadd.f32 %v1136, %v1166
        %1169 = vset.pattern.permute.xlu0 9
        %1170 = vperm.xlu0 %1169, %v848
        %v1171 = vpop.permute.xlu0 %1170
        %1173 = vset.pattern.permute.xlu0 9
        %1174 = vperm.xlu0 %1173, %v850
        %v1175 = vpop.permute.xlu0 %1174
        %v1177 = vlaneseq
        %v1178 = vshrl.u32 %v1177, 7
        %v1179 = vsub.s32 1, %v1178
        %v1180 = vrot.slane %v872, %v1179
        %v1181 = vmul.f32 %v1171, %v1180
        %v1182 = vmul.f32 %v1175, %v1180
        %1183 = vset.pattern.permute.xlu0 9
        %1184 = vperm.xlu0 %1183, %v854
        %v1185 = vpop.permute.xlu0 %1184
        %1187 = vset.pattern.permute.xlu0 9
        %1188 = vperm.xlu0 %1187, %v856
        %v1189 = vpop.permute.xlu0 %1188
        %v1191 = vlaneseq
        %v1192 = vshrl.u32 %v1191, 7
        %v1193 = vsub.s32 1, %v1192
        %v1194 = vrot.slane %v860, %v1193
        %v1195 = vmul.f32 %v1185, %v1194
        %v1196 = vmul.f32 %v1189, %v1194
        %v1197 = vmin.f32 %v1181, %v1195
        %v1198 = vmin.f32 %v1182, %v1196
        %v1199 = vadd.f32 %v1167, %v1197
        %v1200 = vadd.f32 %v1168, %v1198
        %1201 = vset.pattern.permute.xlu0 10
        %1202 = vperm.xlu0 %1201, %v848
        %v1203 = vpop.permute.xlu0 %1202
        %1205 = vset.pattern.permute.xlu0 10
        %1206 = vperm.xlu0 %1205, %v850
        %v1207 = vpop.permute.xlu0 %1206
        %v1209 = vlaneseq
        %v1210 = vshrl.u32 %v1209, 7
        %v1211 = vsub.s32 2, %v1210
        %v1212 = vrot.slane %v872, %v1211
        %v1213 = vmul.f32 %v1203, %v1212
        %v1214 = vmul.f32 %v1207, %v1212
        %1215 = vset.pattern.permute.xlu0 10
        %1216 = vperm.xlu0 %1215, %v854
        %v1217 = vpop.permute.xlu0 %1216
        %1219 = vset.pattern.permute.xlu0 10
        %1220 = vperm.xlu0 %1219, %v856
        %v1221 = vpop.permute.xlu0 %1220
        %v1223 = vlaneseq
        %v1224 = vshrl.u32 %v1223, 7
        %v1225 = vsub.s32 2, %v1224
        %v1226 = vrot.slane %v860, %v1225
        %v1227 = vmul.f32 %v1217, %v1226
        %v1228 = vmul.f32 %v1221, %v1226
        %v1229 = vmin.f32 %v1213, %v1227
        %v1230 = vmin.f32 %v1214, %v1228
        %v1231 = vadd.f32 %v1199, %v1229
        %v1232 = vadd.f32 %v1200, %v1230
        %1233 = vset.pattern.permute.xlu0 11
        %1234 = vperm.xlu0 %1233, %v848
        %v1235 = vpop.permute.xlu0 %1234
        %1237 = vset.pattern.permute.xlu0 11
        %1238 = vperm.xlu0 %1237, %v850
        %v1239 = vpop.permute.xlu0 %1238
        %v1241 = vlaneseq
        %v1242 = vshrl.u32 %v1241, 7
        %v1243 = vsub.s32 3, %v1242
        %v1244 = vrot.slane %v872, %v1243
        %v1245 = vmul.f32 %v1235, %v1244
        %v1246 = vmul.f32 %v1239, %v1244
        %1247 = vset.pattern.permute.xlu0 11
        %1248 = vperm.xlu0 %1247, %v854
        %v1249 = vpop.permute.xlu0 %1248
        %1251 = vset.pattern.permute.xlu0 11
        %1252 = vperm.xlu0 %1251, %v856
        %v1253 = vpop.permute.xlu0 %1252
        %v1255 = vlaneseq
        %v1256 = vshrl.u32 %v1255, 7
        %v1257 = vsub.s32 3, %v1256
        %v1258 = vrot.slane %v860, %v1257
        %v1259 = vmul.f32 %v1249, %v1258
        %v1260 = vmul.f32 %v1253, %v1258
        %v1261 = vmin.f32 %v1245, %v1259
        %v1262 = vmin.f32 %v1246, %v1260
        %v1263 = vadd.f32 %v1231, %v1261
        %v1264 = vadd.f32 %v1232, %v1262
        %1265 = vset.pattern.permute.xlu0 12
        %1266 = vperm.xlu0 %1265, %v848
        %v1267 = vpop.permute.xlu0 %1266
        %1269 = vset.pattern.permute.xlu0 12
        %1270 = vperm.xlu0 %1269, %v850
        %v1271 = vpop.permute.xlu0 %1270
        %v1273 = vlaneseq
        %v1274 = vshrl.u32 %v1273, 7
        %v1275 = vsub.s32 4, %v1274
        %v1276 = vrot.slane %v872, %v1275
        %v1277 = vmul.f32 %v1267, %v1276
        %v1278 = vmul.f32 %v1271, %v1276
        %1279 = vset.pattern.permute.xlu0 12
        %1280 = vperm.xlu0 %1279, %v854
        %v1281 = vpop.permute.xlu0 %1280
        %1283 = vset.pattern.permute.xlu0 12
        %1284 = vperm.xlu0 %1283, %v856
        %v1285 = vpop.permute.xlu0 %1284
        %v1287 = vlaneseq
        %v1288 = vshrl.u32 %v1287, 7
        %v1289 = vsub.s32 4, %v1288
        %v1290 = vrot.slane %v860, %v1289
        %v1291 = vmul.f32 %v1281, %v1290
        %v1292 = vmul.f32 %v1285, %v1290
        %v1293 = vmin.f32 %v1277, %v1291
        %v1294 = vmin.f32 %v1278, %v1292
        %v1295 = vadd.f32 %v1263, %v1293
        %v1296 = vadd.f32 %v1264, %v1294
        %1297 = vset.pattern.permute.xlu0 13
        %1298 = vperm.xlu0 %1297, %v848
        %v1299 = vpop.permute.xlu0 %1298
        %1301 = vset.pattern.permute.xlu0 13
        %1302 = vperm.xlu0 %1301, %v850
        %v1303 = vpop.permute.xlu0 %1302
        %v1305 = vlaneseq
        %v1306 = vshrl.u32 %v1305, 7
        %v1307 = vsub.s32 5, %v1306
        %v1308 = vrot.slane %v872, %v1307
        %v1309 = vmul.f32 %v1299, %v1308
        %v1310 = vmul.f32 %v1303, %v1308
        %1311 = vset.pattern.permute.xlu0 13
        %1312 = vperm.xlu0 %1311, %v854
        %v1313 = vpop.permute.xlu0 %1312
        %1315 = vset.pattern.permute.xlu0 13
        %1316 = vperm.xlu0 %1315, %v856
        %v1317 = vpop.permute.xlu0 %1316
        %v1319 = vlaneseq
        %v1320 = vshrl.u32 %v1319, 7
        %v1321 = vsub.s32 5, %v1320
        %v1322 = vrot.slane %v860, %v1321
        %v1323 = vmul.f32 %v1313, %v1322
        %v1324 = vmul.f32 %v1317, %v1322
        %v1325 = vmin.f32 %v1309, %v1323
        %v1326 = vmin.f32 %v1310, %v1324
        %v1327 = vadd.f32 %v1295, %v1325
        %v1328 = vadd.f32 %v1296, %v1326
        %1329 = vset.pattern.permute.xlu0 14
        %1330 = vperm.xlu0 %1329, %v848
        %v1331 = vpop.permute.xlu0 %1330
        %1333 = vset.pattern.permute.xlu0 14
        %1334 = vperm.xlu0 %1333, %v850
        %v1335 = vpop.permute.xlu0 %1334
        %v1337 = vlaneseq
        %v1338 = vshrl.u32 %v1337, 7
        %v1339 = vsub.s32 6, %v1338
        %v1340 = vrot.slane %v872, %v1339
        %v1341 = vmul.f32 %v1331, %v1340
        %v1342 = vmul.f32 %v1335, %v1340
        %1343 = vset.pattern.permute.xlu0 14
        %1344 = vperm.xlu0 %1343, %v854
        %v1345 = vpop.permute.xlu0 %1344
        %1347 = vset.pattern.permute.xlu0 14
        %1348 = vperm.xlu0 %1347, %v856
        %v1349 = vpop.permute.xlu0 %1348
        %v1351 = vlaneseq
        %v1352 = vshrl.u32 %v1351, 7
        %v1353 = vsub.s32 6, %v1352
        %v1354 = vrot.slane %v860, %v1353
        %v1355 = vmul.f32 %v1345, %v1354
        %v1356 = vmul.f32 %v1349, %v1354
        %v1357 = vmin.f32 %v1341, %v1355
        %v1358 = vmin.f32 %v1342, %v1356
        %v1359 = vadd.f32 %v1327, %v1357
        %v1360 = vadd.f32 %v1328, %v1358
        %1361 = vset.pattern.permute.xlu0 15
        %1362 = vperm.xlu0 %1361, %v848
        %v1363 = vpop.permute.xlu0 %1362
        %1365 = vset.pattern.permute.xlu0 15
        %1366 = vperm.xlu0 %1365, %v850
        %v1367 = vpop.permute.xlu0 %1366
        %v1369 = vlaneseq
        %v1370 = vshrl.u32 %v1369, 7
        %v1371 = vsub.s32 7, %v1370
        %v1372 = vrot.slane %v872, %v1371
        %v1373 = vmul.f32 %v1363, %v1372
        %v1374 = vmul.f32 %v1367, %v1372
        %1375 = vset.pattern.permute.xlu0 15
        %1376 = vperm.xlu0 %1375, %v854
        %v1377 = vpop.permute.xlu0 %1376
        %1379 = vset.pattern.permute.xlu0 15
        %1380 = vperm.xlu0 %1379, %v856
        %v1381 = vpop.permute.xlu0 %1380
        %v1383 = vlaneseq
        %v1384 = vshrl.u32 %v1383, 7
        %v1385 = vsub.s32 7, %v1384
        %v1386 = vrot.slane %v860, %v1385
        %v1387 = vmul.f32 %v1377, %v1386
        %v1388 = vmul.f32 %v1381, %v1386
        %v1389 = vmin.f32 %v1373, %v1387
        %v1390 = vmin.f32 %v1374, %v1388
        %v1391 = vadd.f32 %v1359, %v1389
        %v1392 = vadd.f32 %v1360, %v1390
        %1393 = vset.pattern.permute.xlu0 16
        %1394 = vperm.xlu0 %1393, %v848
        %v1395 = vpop.permute.xlu0 %1394
        %1397 = vset.pattern.permute.xlu0 16
        %1398 = vperm.xlu0 %1397, %v850
        %v1399 = vpop.permute.xlu0 %1398
        %v1401 = vlaneseq
        %v1402 = vshrl.u32 %v1401, 7
        %v1403 = vsub.s32 0, %v1402
        %v1404 = vrot.slane %v874, %v1403
        %v1405 = vmul.f32 %v1395, %v1404
        %v1406 = vmul.f32 %v1399, %v1404
        %1407 = vset.pattern.permute.xlu0 16
        %1408 = vperm.xlu0 %1407, %v854
        %v1409 = vpop.permute.xlu0 %1408
        %1411 = vset.pattern.permute.xlu0 16
        %1412 = vperm.xlu0 %1411, %v856
        %v1413 = vpop.permute.xlu0 %1412
        %v1415 = vlaneseq
        %v1416 = vshrl.u32 %v1415, 7
        %v1417 = vsub.s32 0, %v1416
        %v1418 = vrot.slane %v862, %v1417
        %v1419 = vmul.f32 %v1409, %v1418
        %v1420 = vmul.f32 %v1413, %v1418
        %v1421 = vmin.f32 %v1405, %v1419
        %v1422 = vmin.f32 %v1406, %v1420
        %v1423 = vadd.f32 %v1391, %v1421
        %v1424 = vadd.f32 %v1392, %v1422
        %1425 = vset.pattern.permute.xlu0 17
        %1426 = vperm.xlu0 %1425, %v848
        %v1427 = vpop.permute.xlu0 %1426
        %1429 = vset.pattern.permute.xlu0 17
        %1430 = vperm.xlu0 %1429, %v850
        %v1431 = vpop.permute.xlu0 %1430
        %v1433 = vlaneseq
        %v1434 = vshrl.u32 %v1433, 7
        %v1435 = vsub.s32 1, %v1434
        %v1436 = vrot.slane %v874, %v1435
        %v1437 = vmul.f32 %v1427, %v1436
        %v1438 = vmul.f32 %v1431, %v1436
        %1439 = vset.pattern.permute.xlu0 17
        %1440 = vperm.xlu0 %1439, %v854
        %v1441 = vpop.permute.xlu0 %1440
        %1443 = vset.pattern.permute.xlu0 17
        %1444 = vperm.xlu0 %1443, %v856
        %v1445 = vpop.permute.xlu0 %1444
        %v1447 = vlaneseq
        %v1448 = vshrl.u32 %v1447, 7
        %v1449 = vsub.s32 1, %v1448
        %v1450 = vrot.slane %v862, %v1449
        %v1451 = vmul.f32 %v1441, %v1450
        %v1452 = vmul.f32 %v1445, %v1450
        %v1453 = vmin.f32 %v1437, %v1451
        %v1454 = vmin.f32 %v1438, %v1452
        %v1455 = vadd.f32 %v1423, %v1453
        %v1456 = vadd.f32 %v1424, %v1454
        %1457 = vset.pattern.permute.xlu0 18
        %1458 = vperm.xlu0 %1457, %v848
        %v1459 = vpop.permute.xlu0 %1458
        %1461 = vset.pattern.permute.xlu0 18
        %1462 = vperm.xlu0 %1461, %v850
        %v1463 = vpop.permute.xlu0 %1462
        %v1465 = vlaneseq
        %v1466 = vshrl.u32 %v1465, 7
        %v1467 = vsub.s32 2, %v1466
        %v1468 = vrot.slane %v874, %v1467
        %v1469 = vmul.f32 %v1459, %v1468
        %v1470 = vmul.f32 %v1463, %v1468
        %1471 = vset.pattern.permute.xlu0 18
        %1472 = vperm.xlu0 %1471, %v854
        %v1473 = vpop.permute.xlu0 %1472
        %1475 = vset.pattern.permute.xlu0 18
        %1476 = vperm.xlu0 %1475, %v856
        %v1477 = vpop.permute.xlu0 %1476
        %v1479 = vlaneseq
        %v1480 = vshrl.u32 %v1479, 7
        %v1481 = vsub.s32 2, %v1480
        %v1482 = vrot.slane %v862, %v1481
        %v1483 = vmul.f32 %v1473, %v1482
        %v1484 = vmul.f32 %v1477, %v1482
        %v1485 = vmin.f32 %v1469, %v1483
        %v1486 = vmin.f32 %v1470, %v1484
        %v1487 = vadd.f32 %v1455, %v1485
        %v1488 = vadd.f32 %v1456, %v1486
        %1489 = vset.pattern.permute.xlu0 19
        %1490 = vperm.xlu0 %1489, %v848
        %v1491 = vpop.permute.xlu0 %1490
        %1493 = vset.pattern.permute.xlu0 19
        %1494 = vperm.xlu0 %1493, %v850
        %v1495 = vpop.permute.xlu0 %1494
        %v1497 = vlaneseq
        %v1498 = vshrl.u32 %v1497, 7
        %v1499 = vsub.s32 3, %v1498
        %v1500 = vrot.slane %v874, %v1499
        %v1501 = vmul.f32 %v1491, %v1500
        %v1502 = vmul.f32 %v1495, %v1500
        %1503 = vset.pattern.permute.xlu0 19
        %1504 = vperm.xlu0 %1503, %v854
        %v1505 = vpop.permute.xlu0 %1504
        %1507 = vset.pattern.permute.xlu0 19
        %1508 = vperm.xlu0 %1507, %v856
        %v1509 = vpop.permute.xlu0 %1508
        %v1511 = vlaneseq
        %v1512 = vshrl.u32 %v1511, 7
        %v1513 = vsub.s32 3, %v1512
        %v1514 = vrot.slane %v862, %v1513
        %v1515 = vmul.f32 %v1505, %v1514
        %v1516 = vmul.f32 %v1509, %v1514
        %v1517 = vmin.f32 %v1501, %v1515
        %v1518 = vmin.f32 %v1502, %v1516
        %v1519 = vadd.f32 %v1487, %v1517
        %v1520 = vadd.f32 %v1488, %v1518
        %1521 = vset.pattern.permute.xlu0 20
        %1522 = vperm.xlu0 %1521, %v848
        %v1523 = vpop.permute.xlu0 %1522
        %1525 = vset.pattern.permute.xlu0 20
        %1526 = vperm.xlu0 %1525, %v850
        %v1527 = vpop.permute.xlu0 %1526
        %v1529 = vlaneseq
        %v1530 = vshrl.u32 %v1529, 7
        %v1531 = vsub.s32 4, %v1530
        %v1532 = vrot.slane %v874, %v1531
        %v1533 = vmul.f32 %v1523, %v1532
        %v1534 = vmul.f32 %v1527, %v1532
        %1535 = vset.pattern.permute.xlu0 20
        %1536 = vperm.xlu0 %1535, %v854
        %v1537 = vpop.permute.xlu0 %1536
        %1539 = vset.pattern.permute.xlu0 20
        %1540 = vperm.xlu0 %1539, %v856
        %v1541 = vpop.permute.xlu0 %1540
        %v1543 = vlaneseq
        %v1544 = vshrl.u32 %v1543, 7
        %v1545 = vsub.s32 4, %v1544
        %v1546 = vrot.slane %v862, %v1545
        %v1547 = vmul.f32 %v1537, %v1546
        %v1548 = vmul.f32 %v1541, %v1546
        %v1549 = vmin.f32 %v1533, %v1547
        %v1550 = vmin.f32 %v1534, %v1548
        %v1551 = vadd.f32 %v1519, %v1549
        %v1552 = vadd.f32 %v1520, %v1550
        %1553 = vset.pattern.permute.xlu0 21
        %1554 = vperm.xlu0 %1553, %v848
        %v1555 = vpop.permute.xlu0 %1554
        %1557 = vset.pattern.permute.xlu0 21
        %1558 = vperm.xlu0 %1557, %v850
        %v1559 = vpop.permute.xlu0 %1558
        %v1561 = vlaneseq
        %v1562 = vshrl.u32 %v1561, 7
        %v1563 = vsub.s32 5, %v1562
        %v1564 = vrot.slane %v874, %v1563
        %v1565 = vmul.f32 %v1555, %v1564
        %v1566 = vmul.f32 %v1559, %v1564
        %1567 = vset.pattern.permute.xlu0 21
        %1568 = vperm.xlu0 %1567, %v854
        %v1569 = vpop.permute.xlu0 %1568
        %1571 = vset.pattern.permute.xlu0 21
        %1572 = vperm.xlu0 %1571, %v856
        %v1573 = vpop.permute.xlu0 %1572
        %v1575 = vlaneseq
        %v1576 = vshrl.u32 %v1575, 7
        %v1577 = vsub.s32 5, %v1576
        %v1578 = vrot.slane %v862, %v1577
        %v1579 = vmul.f32 %v1569, %v1578
        %v1580 = vmul.f32 %v1573, %v1578
        %v1581 = vmin.f32 %v1565, %v1579
        %v1582 = vmin.f32 %v1566, %v1580
        %v1583 = vadd.f32 %v1551, %v1581
        %v1584 = vadd.f32 %v1552, %v1582
        %1585 = vset.pattern.permute.xlu0 22
        %1586 = vperm.xlu0 %1585, %v848
        %v1587 = vpop.permute.xlu0 %1586
        %1589 = vset.pattern.permute.xlu0 22
        %1590 = vperm.xlu0 %1589, %v850
        %v1591 = vpop.permute.xlu0 %1590
        %v1593 = vlaneseq
        %v1594 = vshrl.u32 %v1593, 7
        %v1595 = vsub.s32 6, %v1594
        %v1596 = vrot.slane %v874, %v1595
        %v1597 = vmul.f32 %v1587, %v1596
        %v1598 = vmul.f32 %v1591, %v1596
        %1599 = vset.pattern.permute.xlu0 22
        %1600 = vperm.xlu0 %1599, %v854
        %v1601 = vpop.permute.xlu0 %1600
        %1603 = vset.pattern.permute.xlu0 22
        %1604 = vperm.xlu0 %1603, %v856
        %v1605 = vpop.permute.xlu0 %1604
        %v1607 = vlaneseq
        %v1608 = vshrl.u32 %v1607, 7
        %v1609 = vsub.s32 6, %v1608
        %v1610 = vrot.slane %v862, %v1609
        %v1611 = vmul.f32 %v1601, %v1610
        %v1612 = vmul.f32 %v1605, %v1610
        %v1613 = vmin.f32 %v1597, %v1611
        %v1614 = vmin.f32 %v1598, %v1612
        %v1615 = vadd.f32 %v1583, %v1613
        %v1616 = vadd.f32 %v1584, %v1614
        %1617 = vset.pattern.permute.xlu0 23
        %1618 = vperm.xlu0 %1617, %v848
        %v1619 = vpop.permute.xlu0 %1618
        %1621 = vset.pattern.permute.xlu0 23
        %1622 = vperm.xlu0 %1621, %v850
        %v1623 = vpop.permute.xlu0 %1622
        %v1625 = vlaneseq
        %v1626 = vshrl.u32 %v1625, 7
        %v1627 = vsub.s32 7, %v1626
        %v1628 = vrot.slane %v874, %v1627
        %v1629 = vmul.f32 %v1619, %v1628
        %v1630 = vmul.f32 %v1623, %v1628
        %1631 = vset.pattern.permute.xlu0 23
        %1632 = vperm.xlu0 %1631, %v854
        %v1633 = vpop.permute.xlu0 %1632
        %1635 = vset.pattern.permute.xlu0 23
        %1636 = vperm.xlu0 %1635, %v856
        %v1637 = vpop.permute.xlu0 %1636
        %v1639 = vlaneseq
        %v1640 = vshrl.u32 %v1639, 7
        %v1641 = vsub.s32 7, %v1640
        %v1642 = vrot.slane %v862, %v1641
        %v1643 = vmul.f32 %v1633, %v1642
        %v1644 = vmul.f32 %v1637, %v1642
        %v1645 = vmin.f32 %v1629, %v1643
        %v1646 = vmin.f32 %v1630, %v1644
        %v1647 = vadd.f32 %v1615, %v1645
        %v1648 = vadd.f32 %v1616, %v1646
        %1649 = vset.pattern.permute.xlu0 24
        %1650 = vperm.xlu0 %1649, %v848
        %v1651 = vpop.permute.xlu0 %1650
        %1653 = vset.pattern.permute.xlu0 24
        %1654 = vperm.xlu0 %1653, %v850
        %v1655 = vpop.permute.xlu0 %1654
        %v1657 = vlaneseq
        %v1658 = vshrl.u32 %v1657, 7
        %v1659 = vsub.s32 0, %v1658
        %v1660 = vrot.slane %v876, %v1659
        %v1661 = vmul.f32 %v1651, %v1660
        %v1662 = vmul.f32 %v1655, %v1660
        %1663 = vset.pattern.permute.xlu0 24
        %1664 = vperm.xlu0 %1663, %v854
        %v1665 = vpop.permute.xlu0 %1664
        %1667 = vset.pattern.permute.xlu0 24
        %1668 = vperm.xlu0 %1667, %v856
        %v1669 = vpop.permute.xlu0 %1668
        %v1671 = vlaneseq
        %v1672 = vshrl.u32 %v1671, 7
        %v1673 = vsub.s32 0, %v1672
        %v1674 = vrot.slane %v864, %v1673
        %v1675 = vmul.f32 %v1665, %v1674
        %v1676 = vmul.f32 %v1669, %v1674
        %v1677 = vmin.f32 %v1661, %v1675
        %v1678 = vmin.f32 %v1662, %v1676
        %v1679 = vadd.f32 %v1647, %v1677
        %v1680 = vadd.f32 %v1648, %v1678
        %1681 = vset.pattern.permute.xlu0 25
        %1682 = vperm.xlu0 %1681, %v848
        %v1683 = vpop.permute.xlu0 %1682
        %1685 = vset.pattern.permute.xlu0 25
        %1686 = vperm.xlu0 %1685, %v850
        %v1687 = vpop.permute.xlu0 %1686
        %v1689 = vlaneseq
        %v1690 = vshrl.u32 %v1689, 7
        %v1691 = vsub.s32 1, %v1690
        %v1692 = vrot.slane %v876, %v1691
        %v1693 = vmul.f32 %v1683, %v1692
        %v1694 = vmul.f32 %v1687, %v1692
        %1695 = vset.pattern.permute.xlu0 25
        %1696 = vperm.xlu0 %1695, %v854
        %v1697 = vpop.permute.xlu0 %1696
        %1699 = vset.pattern.permute.xlu0 25
        %1700 = vperm.xlu0 %1699, %v856
        %v1701 = vpop.permute.xlu0 %1700
        %v1703 = vlaneseq
        %v1704 = vshrl.u32 %v1703, 7
        %v1705 = vsub.s32 1, %v1704
        %v1706 = vrot.slane %v864, %v1705
        %v1707 = vmul.f32 %v1697, %v1706
        %v1708 = vmul.f32 %v1701, %v1706
        %v1709 = vmin.f32 %v1693, %v1707
        %v1710 = vmin.f32 %v1694, %v1708
        %v1711 = vadd.f32 %v1679, %v1709
        %v1712 = vadd.f32 %v1680, %v1710
        %1713 = vset.pattern.permute.xlu0 26
        %1714 = vperm.xlu0 %1713, %v848
        %v1715 = vpop.permute.xlu0 %1714
        %1717 = vset.pattern.permute.xlu0 26
        %1718 = vperm.xlu0 %1717, %v850
        %v1719 = vpop.permute.xlu0 %1718
        %v1721 = vlaneseq
        %v1722 = vshrl.u32 %v1721, 7
        %v1723 = vsub.s32 2, %v1722
        %v1724 = vrot.slane %v876, %v1723
        %v1725 = vmul.f32 %v1715, %v1724
        %v1726 = vmul.f32 %v1719, %v1724
        %1727 = vset.pattern.permute.xlu0 26
        %1728 = vperm.xlu0 %1727, %v854
        %v1729 = vpop.permute.xlu0 %1728
        %1731 = vset.pattern.permute.xlu0 26
        %1732 = vperm.xlu0 %1731, %v856
        %v1733 = vpop.permute.xlu0 %1732
        %v1735 = vlaneseq
        %v1736 = vshrl.u32 %v1735, 7
        %v1737 = vsub.s32 2, %v1736
        %v1738 = vrot.slane %v864, %v1737
        %v1739 = vmul.f32 %v1729, %v1738
        %v1740 = vmul.f32 %v1733, %v1738
        %v1741 = vmin.f32 %v1725, %v1739
        %v1742 = vmin.f32 %v1726, %v1740
        %v1743 = vadd.f32 %v1711, %v1741
        %v1744 = vadd.f32 %v1712, %v1742
        %1745 = vset.pattern.permute.xlu0 27
        %1746 = vperm.xlu0 %1745, %v848
        %v1747 = vpop.permute.xlu0 %1746
        %1749 = vset.pattern.permute.xlu0 27
        %1750 = vperm.xlu0 %1749, %v850
        %v1751 = vpop.permute.xlu0 %1750
        %v1753 = vlaneseq
        %v1754 = vshrl.u32 %v1753, 7
        %v1755 = vsub.s32 3, %v1754
        %v1756 = vrot.slane %v876, %v1755
        %v1757 = vmul.f32 %v1747, %v1756
        %v1758 = vmul.f32 %v1751, %v1756
        %1759 = vset.pattern.permute.xlu0 27
        %1760 = vperm.xlu0 %1759, %v854
        %v1761 = vpop.permute.xlu0 %1760
        %1763 = vset.pattern.permute.xlu0 27
        %1764 = vperm.xlu0 %1763, %v856
        %v1765 = vpop.permute.xlu0 %1764
        %v1767 = vlaneseq
        %v1768 = vshrl.u32 %v1767, 7
        %v1769 = vsub.s32 3, %v1768
        %v1770 = vrot.slane %v864, %v1769
        %v1771 = vmul.f32 %v1761, %v1770
        %v1772 = vmul.f32 %v1765, %v1770
        %v1773 = vmin.f32 %v1757, %v1771
        %v1774 = vmin.f32 %v1758, %v1772
        %v1775 = vadd.f32 %v1743, %v1773
        %v1776 = vadd.f32 %v1744, %v1774
        %1777 = vset.pattern.permute.xlu0 28
        %1778 = vperm.xlu0 %1777, %v848
        %v1779 = vpop.permute.xlu0 %1778
        %1781 = vset.pattern.permute.xlu0 28
        %1782 = vperm.xlu0 %1781, %v850
        %v1783 = vpop.permute.xlu0 %1782
        %v1785 = vlaneseq
        %v1786 = vshrl.u32 %v1785, 7
        %v1787 = vsub.s32 4, %v1786
        %v1788 = vrot.slane %v876, %v1787
        %v1789 = vmul.f32 %v1779, %v1788
        %v1790 = vmul.f32 %v1783, %v1788
        %1791 = vset.pattern.permute.xlu0 28
        %1792 = vperm.xlu0 %1791, %v854
        %v1793 = vpop.permute.xlu0 %1792
        %1795 = vset.pattern.permute.xlu0 28
        %1796 = vperm.xlu0 %1795, %v856
        %v1797 = vpop.permute.xlu0 %1796
        %v1799 = vlaneseq
        %v1800 = vshrl.u32 %v1799, 7
        %v1801 = vsub.s32 4, %v1800
        %v1802 = vrot.slane %v864, %v1801
        %v1803 = vmul.f32 %v1793, %v1802
        %v1804 = vmul.f32 %v1797, %v1802
        %v1805 = vmin.f32 %v1789, %v1803
        %v1806 = vmin.f32 %v1790, %v1804
        %v1807 = vadd.f32 %v1775, %v1805
        %v1808 = vadd.f32 %v1776, %v1806
        %1809 = vset.pattern.permute.xlu0 29
        %1810 = vperm.xlu0 %1809, %v848
        %v1811 = vpop.permute.xlu0 %1810
        %1813 = vset.pattern.permute.xlu0 29
        %1814 = vperm.xlu0 %1813, %v850
        %v1815 = vpop.permute.xlu0 %1814
        %v1817 = vlaneseq
        %v1818 = vshrl.u32 %v1817, 7
        %v1819 = vsub.s32 5, %v1818
        %v1820 = vrot.slane %v876, %v1819
        %v1821 = vmul.f32 %v1811, %v1820
        %v1822 = vmul.f32 %v1815, %v1820
        %1823 = vset.pattern.permute.xlu0 29
        %1824 = vperm.xlu0 %1823, %v854
        %v1825 = vpop.permute.xlu0 %1824
        %1827 = vset.pattern.permute.xlu0 29
        %1828 = vperm.xlu0 %1827, %v856
        %v1829 = vpop.permute.xlu0 %1828
        %v1831 = vlaneseq
        %v1832 = vshrl.u32 %v1831, 7
        %v1833 = vsub.s32 5, %v1832
        %v1834 = vrot.slane %v864, %v1833
        %v1835 = vmul.f32 %v1825, %v1834
        %v1836 = vmul.f32 %v1829, %v1834
        %v1837 = vmin.f32 %v1821, %v1835
        %v1838 = vmin.f32 %v1822, %v1836
        %v1839 = vadd.f32 %v1807, %v1837
        %v1840 = vadd.f32 %v1808, %v1838
        %1841 = vset.pattern.permute.xlu0 30
        %1842 = vperm.xlu0 %1841, %v848
        %v1843 = vpop.permute.xlu0 %1842
        %1845 = vset.pattern.permute.xlu0 30
        %1846 = vperm.xlu0 %1845, %v850
        %v1847 = vpop.permute.xlu0 %1846
        %v1849 = vlaneseq
        %v1850 = vshrl.u32 %v1849, 7
        %v1851 = vsub.s32 6, %v1850
        %v1852 = vrot.slane %v876, %v1851
        %v1853 = vmul.f32 %v1843, %v1852
        %v1854 = vmul.f32 %v1847, %v1852
        %1855 = vset.pattern.permute.xlu0 30
        %1856 = vperm.xlu0 %1855, %v854
        %v1857 = vpop.permute.xlu0 %1856
        %1859 = vset.pattern.permute.xlu0 30
        %1860 = vperm.xlu0 %1859, %v856
        %v1861 = vpop.permute.xlu0 %1860
        %v1863 = vlaneseq
        %v1864 = vshrl.u32 %v1863, 7
        %v1865 = vsub.s32 6, %v1864
        %v1866 = vrot.slane %v864, %v1865
        %v1867 = vmul.f32 %v1857, %v1866
        %v1868 = vmul.f32 %v1861, %v1866
        %v1869 = vmin.f32 %v1853, %v1867
        %v1870 = vmin.f32 %v1854, %v1868
        %v1871 = vadd.f32 %v1839, %v1869
        %v1872 = vadd.f32 %v1840, %v1870
        %1873 = vset.pattern.permute.xlu0 31
        %1874 = vperm.xlu0 %1873, %v848
        %v1875 = vpop.permute.xlu0 %1874
        %1877 = vset.pattern.permute.xlu0 31
        %1878 = vperm.xlu0 %1877, %v850
        %v1879 = vpop.permute.xlu0 %1878
        %v1881 = vlaneseq
        %v1882 = vshrl.u32 %v1881, 7
        %v1883 = vsub.s32 7, %v1882
        %v1884 = vrot.slane %v876, %v1883
        %v1885 = vmul.f32 %v1875, %v1884
        %v1886 = vmul.f32 %v1879, %v1884
        %1887 = vset.pattern.permute.xlu0 31
        %1888 = vperm.xlu0 %1887, %v854
        %v1889 = vpop.permute.xlu0 %1888
        %1891 = vset.pattern.permute.xlu0 31
        %1892 = vperm.xlu0 %1891, %v856
        %v1893 = vpop.permute.xlu0 %1892
        %v1895 = vlaneseq
        %v1896 = vshrl.u32 %v1895, 7
        %v1897 = vsub.s32 7, %v1896
        %v1898 = vrot.slane %v864, %v1897
        %v1899 = vmul.f32 %v1889, %v1898
        %v1900 = vmul.f32 %v1893, %v1898
        %v1901 = vmin.f32 %v1885, %v1899
        %v1902 = vmin.f32 %v1886, %v1900
        %v1903 = vadd.f32 %v1871, %v1901
        %v1904 = vadd.f32 %v1872, %v1902
        %s1905 = sld [smem:[#allocation2]]
        %1907 = vset.pattern.permute.xlu0 0
        %1908 = vperm.xlu0 %1907, %v475
        %v1909 = vpop.permute.xlu0 %1908
        %1912 = vset.pattern.permute.xlu0 0
        %1913 = vperm.xlu0 %1912, %v476
        %v1914 = vpop.permute.xlu0 %1913
        %v1916 = vlaneseq
        %v1917 = vshrl.u32 %v1916, 7
        %v1918 = vsub.s32 0, %v1917
        %v1919 = vrot.slane %v478, %v1918
        %v1920 = vsub.f32 %v1909, %v1919
        %v1921 = vsub.f32 %v1914, %v1919
        %v1922 = vand.u32 2147483647, %v1920
        %v1923 = vand.u32 2147483647, %v1921
        %v1924 = vsub.f32 0.0, %v1922
        %v1925 = vsub.f32 0.0, %v1923
        %v1926 = vmul.f32 %v1924, 1.442695
        %v1927 = vpow.pop %v1926
        %v1928 = vmul.f32 %v1925, 1.442695
        %v1929 = vpow.pop %v1928
        %v1930 = vstv %s1905
        %v1931 = vmul.f32 %v1930, %v1927
        %v1932 = vmul.f32 %v1930, %v1929
        %v1933 = vadd.f32 %v1903, %v1931
        %v1934 = vadd.f32 %v1904, %v1932
        %s1935 = sld [smem:[#allocation2 + $0x1]]
        %1936 = vset.pattern.permute.xlu0 1
        %1937 = vperm.xlu0 %1936, %v475
        %v1938 = vpop.permute.xlu0 %1937
        %1940 = vset.pattern.permute.xlu0 1
        %1941 = vperm.xlu0 %1940, %v476
        %v1942 = vpop.permute.xlu0 %1941
        %v1944 = vlaneseq
        %v1945 = vshrl.u32 %v1944, 7
        %v1946 = vsub.s32 1, %v1945
        %v1947 = vrot.slane %v478, %v1946
        %v1948 = vsub.f32 %v1938, %v1947
        %v1949 = vsub.f32 %v1942, %v1947
        %v1950 = vand.u32 2147483647, %v1948
        %v1951 = vand.u32 2147483647, %v1949
        %v1952 = vsub.f32 0.0, %v1950
        %v1953 = vsub.f32 0.0, %v1951
        %v1954 = vmul.f32 %v1952, 1.442695
        %v1955 = vpow.pop %v1954
        %v1956 = vmul.f32 %v1953, 1.442695
        %v1957 = vpow.pop %v1956
        %v1958 = vstv %s1935
        %v1959 = vmul.f32 %v1958, %v1955
        %v1960 = vmul.f32 %v1958, %v1957
        %v1961 = vadd.f32 %v1933, %v1959
        %v1962 = vadd.f32 %v1934, %v1960
        %s1963 = sld [smem:[#allocation2 + $0x2]]
        %1964 = vset.pattern.permute.xlu0 2
        %1965 = vperm.xlu0 %1964, %v475
        %v1966 = vpop.permute.xlu0 %1965
        %1968 = vset.pattern.permute.xlu0 2
        %1969 = vperm.xlu0 %1968, %v476
        %v1970 = vpop.permute.xlu0 %1969
        %v1972 = vlaneseq
        %v1973 = vshrl.u32 %v1972, 7
        %v1974 = vsub.s32 2, %v1973
        %v1975 = vrot.slane %v478, %v1974
        %v1976 = vsub.f32 %v1966, %v1975
        %v1977 = vsub.f32 %v1970, %v1975
        %v1978 = vand.u32 2147483647, %v1976
        %v1979 = vand.u32 2147483647, %v1977
        %v1980 = vsub.f32 0.0, %v1978
        %v1981 = vsub.f32 0.0, %v1979
        %v1982 = vmul.f32 %v1980, 1.442695
        %v1983 = vpow.pop %v1982
        %v1984 = vmul.f32 %v1981, 1.442695
        %v1985 = vpow.pop %v1984
        %v1986 = vstv %s1963
        %v1987 = vmul.f32 %v1986, %v1983
        %v1988 = vmul.f32 %v1986, %v1985
        %v1989 = vadd.f32 %v1961, %v1987
        %v1990 = vadd.f32 %v1962, %v1988
        %v1991 = vmul.f32 %v1989, 0.03125
        %v1992 = vmul.f32 %v1990, 0.03125
        %v1993 = vsel %vm581, %v1991, -inf
        %1994 = vmax.xlane.f32.xlu0 %v1993
        %v1995 = vpop.xlane.xlu0 %1994
        %v1996 = vsel %vm581, %v1992, -inf
        %1997 = vmax.xlane.f32.xlu0 %v1996
        %v1998 = vpop.xlane.xlu0 %1997
        %v1999 = vsub.f32 %v1991, %v1995
        %v2000 = vsub.f32 %v1992, %v1998
        %v2001 = vmul.f32 %v1999, 1.442695
        %v2002 = vpow.pop %v2001
        %v2003 = vmul.f32 %v2000, 1.442695
        %v2004 = vpow.pop %v2003
        %v2005 = vsel %vm581, %v2002, 0.0
        %2006 = vadd.xlane.f32.xlu0 %v2005
        %v2007 = vpop.xlane.xlu0 %2006
        %v2008 = vsel %vm581, %v2004, 0.0
        %2009 = vadd.xlane.f32.xlu0 %v2008
        %v2010 = vpop.xlane.xlu0 %2009
        %v2011 = vrcp.pop %v2007
        %v2012 = vrcp.pop %v2010
        %v2013 = vmul.f32 %v2007, %v2011
        %v2014 = vmul.f32 %v2010, %v2012
        %v2015 = vsub.f32 2.0, %v2013
        %v2016 = vsub.f32 2.0, %v2014
        %v2017 = vmul.f32 %v2011, %v2015
        %v2018 = vmul.f32 %v2012, %v2016
        %v2019 = vmul.f32 %v2002, %v2017
        %v2020 = vmul.f32 %v2004, %v2018
        %v2022 = vsel %vm581, %v2019, 0
        %v2025 = vsel %vm581, %v2020, 0
        %2027 = vmatprep.subr.mxu0 0.0
        %2028 = vmatpush1.msra.mxu0 %v765
        %2029 = vmatprep.subr.mxu0 0.0
        %2030 = vmatpush1.msra.mxu0 0.0
        %2031 = vmatprep.subr.mxu0 0.0
        %2032 = vmatpush1.msra.mxu0 0.0
        %2033 = vmatprep.subr.mxu0 0.0
        %2034 = vmatpush1.msra.mxu0 0.0
        %2035 = vmatprep.subr.mxu0 0.0
        %2036 = vmatpush1.msra.mxu0 0.0
        %2037 = vmatprep.subr.mxu0 0.0
        %2038 = vmatpush1.msra.mxu0 0.0
        %2039 = vmatprep.subr.mxu0 0.0
        %2040 = vmatpush1.msra.mxu0 0.0
        %2041 = vmatprep.subr.mxu0 0.0
        %2042 = vmatpush1.msra.mxu0 0.0
        %2043 = vmatprep.subr.mxu0 0.0
        %2044 = vmatpush1.msra.mxu0 0.0
        %2045 = vmatprep.subr.mxu0 0.0
        %2046 = vmatpush1.msra.mxu0 0.0
        %2047 = vmatprep.subr.mxu0 0.0
        %2048 = vmatpush1.msra.mxu0 0.0
        %2049 = vmatprep.subr.mxu0 0.0
        %2050 = vmatpush1.msra.mxu0 0.0
        %2051 = vmatprep.subr.mxu0 0.0
        %2052 = vmatpush1.msra.mxu0 0.0
        %2053 = vmatprep.subr.mxu0 0.0
        %2054 = vmatpush1.msra.mxu0 0.0
        %2055 = vmatprep.subr.mxu0 0.0
        %2056 = vmatpush1.msra.mxu0 0.0
        %2057 = vmatprep.subr.mxu0 0.0
        %2058 = vmatpush1.msra.mxu0 0.0
        %2059 = vmatprep.subr.mxu0 0.0
        %2060 = vmatpush1.msra.mxu0 0.0
        %2061 = vmatprep.subr.mxu0 0.0
        %2062 = vmatpush1.msra.mxu0 0.0
        %2063 = vmatprep.subr.mxu0 0.0
        %2064 = vmatpush1.msra.mxu0 0.0
        %2065 = vmatprep.subr.mxu0 0.0
        %2066 = vmatpush1.msra.mxu0 0.0
        %2067 = vmatprep.subr.mxu0 0.0
        %2068 = vmatpush1.msra.mxu0 0.0
        %2069 = vmatprep.subr.mxu0 0.0
        %2070 = vmatpush1.msra.mxu0 0.0
        %2071 = vmatprep.subr.mxu0 0.0
        %2072 = vmatpush1.msra.mxu0 0.0
        %2073 = vmatprep.subr.mxu0 0.0
        %2074 = vmatpush1.msra.mxu0 0.0
        %2075 = vmatprep.subr.mxu0 0.0
        %2076 = vmatpush1.msra.mxu0 0.0
        %2077 = vmatprep.subr.mxu0 0.0
        %2078 = vmatpush1.msra.mxu0 0.0
        %2079 = vmatprep.subr.mxu0 0.0
        %2080 = vmatpush1.msra.mxu0 0.0
        %2081 = vmatprep.subr.mxu0 0.0
        %2082 = vmatpush1.msra.mxu0 0.0
        %2083 = vmatprep.subr.mxu0 0.0
        %2084 = vmatpush1.msra.mxu0 0.0
        %2085 = vmatprep.subr.mxu0 0.0
        %2086 = vmatpush1.msra.mxu0 0.0
        %2087 = vmatprep.subr.mxu0 0.0
        %2088 = vmatpush1.msra.mxu0 0.0
        %2089 = vmatprep.subr.mxu0 0.0
        %2090 = vmatpush1.msra.mxu0 0.0
        %2091 = vmatprep.mubr.f32.mxu0 0.0
        %2092 = vmatmul.mubr.f32.gmra.mrb[0].mxu0 %v2022
        %v2093 = vpop.f32.mrb[0].mxu0
        %v2094 = vadd.f32 0.0, %v2093
        %v2095 = vpop.f32.mrb[0].mxu0
        %2096 = vmatprep.mubr.f32.mxu0 0.0
        %2097 = vmatmul.mubr.f32.gmra.mrb[0].mxu0 %v2025
        %v2098 = vpop.f32.mrb[0].mxu0
        %v2099 = vadd.f32 0.0, %v2098
        %v2100 = vpop.f32.mrb[0].mxu0
        %2101 = vdwg.mxu0
        %v2102 = vld [vmem:[%s7] sm:$0xff]
        %v2103 = vld [vmem:[%s7 + $0x8] sm:$0xff]
        %v2104 = vld [vmem:[%s7 + $0x10] sm:$0xff]
        %v2105 = vld [vmem:[%s7 + $0x18] sm:$0xff]
        %v2106 = vld [vmem:[%s8] sm:$0x1]
        %v2108 = vlaneseq
        %v2109 = vshrl.u32 %v2108, 7
        %v2110 = vsub.s32 0, %v2109
        %v2111 = vrot.slane %v2106, %v2110
        %v2114 = vsel %vm483, %v2094, 0
        %v2117 = vsel %vm483, %v2099, 0
        %v2120 = vsel %vm483, %v2102, 0
        %v2123 = vsel %vm483, %v2103, 0
        %v2126 = vsel %vm483, %v2104, 0
        %v2129 = vsel %vm483, %v2105, 0
        %2131 = vmatprep.subr.mxu0 0.0
        %2132 = vmatpush1.xpose.msra.mxu0 %v2120
        %2133 = vmatprep.subr.mxu0 0.0
        %2134 = vmatpush1.xpose.msra.mxu0 %v2123
        %2135 = vmatprep.subr.mxu0 0.0
        %2136 = vmatpush1.xpose.msra.mxu0 %v2126
        %2137 = vmatprep.subr.mxu0 0.0
        %2138 = vmatpush1.xpose.msra.mxu0 %v2129
        %2139 = vmatprep.subr.mxu0 0.0
        %2140 = vmatpush1.xpose.msra.mxu0 0.0
        %2141 = vmatprep.subr.mxu0 0.0
        %2142 = vmatpush1.xpose.msra.mxu0 0.0
        %2143 = vmatprep.subr.mxu0 0.0
        %2144 = vmatpush1.xpose.msra.mxu0 0.0
        %2145 = vmatprep.subr.mxu0 0.0
        %2146 = vmatpush1.xpose.msra.mxu0 0.0
        %2147 = vmatprep.subr.mxu0 0.0
        %2148 = vmatpush1.xpose.msra.mxu0 0.0
        %2149 = vmatprep.subr.mxu0 0.0
        %2150 = vmatpush1.xpose.msra.mxu0 0.0
        %2151 = vmatprep.subr.mxu0 0.0
        %2152 = vmatpush1.xpose.msra.mxu0 0.0
        %2153 = vmatprep.subr.mxu0 0.0
        %2154 = vmatpush1.xpose.msra.mxu0 0.0
        %2155 = vmatprep.subr.mxu0 0.0
        %2156 = vmatpush1.xpose.msra.mxu0 0.0
        %2157 = vmatprep.subr.mxu0 0.0
        %2158 = vmatpush1.xpose.msra.mxu0 0.0
        %2159 = vmatprep.subr.mxu0 0.0
        %2160 = vmatpush1.xpose.msra.mxu0 0.0
        %2161 = vmatprep.subr.mxu0 0.0
        %2162 = vmatpush1.xpose.msra.mxu0 0.0
        %2163 = vmatprep.subr.mxu0 0.0
        %2164 = vmatpush1.xpose.msra.mxu0 0.0
        %2165 = vmatprep.subr.mxu0 0.0
        %2166 = vmatpush1.xpose.msra.mxu0 0.0
        %2167 = vmatprep.subr.mxu0 0.0
        %2168 = vmatpush1.xpose.msra.mxu0 0.0
        %2169 = vmatprep.subr.mxu0 0.0
        %2170 = vmatpush1.xpose.msra.mxu0 0.0
        %2171 = vmatprep.subr.mxu0 0.0
        %2172 = vmatpush1.xpose.msra.mxu0 0.0
        %2173 = vmatprep.subr.mxu0 0.0
        %2174 = vmatpush1.xpose.msra.mxu0 0.0
        %2175 = vmatprep.subr.mxu0 0.0
        %2176 = vmatpush1.xpose.msra.mxu0 0.0
        %2177 = vmatprep.subr.mxu0 0.0
        %2178 = vmatpush1.xpose.msra.mxu0 0.0
        %2179 = vmatprep.subr.mxu0 0.0
        %2180 = vmatpush1.xpose.msra.mxu0 0.0
        %2181 = vmatprep.subr.mxu0 0.0
        %2182 = vmatpush1.xpose.msra.mxu0 0.0
        %2183 = vmatprep.subr.mxu0 0.0
        %2184 = vmatpush1.xpose.msra.mxu0 0.0
        %2185 = vmatprep.subr.mxu0 0.0
        %2186 = vmatpush1.xpose.msra.mxu0 0.0
        %2187 = vmatprep.subr.mxu0 0.0
        %2188 = vmatpush1.xpose.msra.mxu0 0.0
        %2189 = vmatprep.subr.mxu0 0.0
        %2190 = vmatpush1.xpose.msra.mxu0 0.0
        %2191 = vmatprep.subr.mxu0 0.0
        %2192 = vmatpush1.xpose.msra.mxu0 0.0
        %2193 = vmatprep.subr.mxu0 0.0
        %2194 = vmatpush1.xpose.msra.mxu0 0.0
        %2195 = vmatprep.mubr.f32.mxu0 0.0
        %2196 = vmatmul.mubr.f32.gmra.mrb[0].mxu0 %v2114
        %v2197 = vpop.f32.mrb[0].mxu0
        %v2198 = vadd.f32 %v2111, %v2197
        %v2199 = vpop.f32.mrb[0].mxu0
        %2200 = vmatprep.mubr.f32.mxu0 0.0
        %2201 = vmatmul.mubr.f32.gmra.mrb[0].mxu0 %v2117
        %v2202 = vpop.f32.mrb[0].mxu0
        %v2203 = vadd.f32 %v2111, %v2202
        %v2204 = vpop.f32.mrb[0].mxu0
        %2205 = vdwg.mxu0
        %2206 = vst.msk [vmem:[%s443] sm:$0xff] %vm483, %v2198
        %2207 = vst.msk [vmem:[%s443 + $0x8] sm:$0xff] %vm483, %v2203
        %s2208 = sand.u32 %s281, 1
        %s2209 = scalar_lea.sflag [#allocation3], %s2208
        %s2210 = sand.u32 %s281, 1
        %s2211 = smul.addr %s2210, 16
        %s2212 = scalar_lea.vmem [#allocation5], %s2211
        // Predicated region
        $region65: #{tpu_custom_call.1} parent=59 // pred_check
          %p2213 = pneg %p291
        $region66: #{tpu_custom_call.1} parent=59 // pred_check_branch
          %2215 = sbr.rel (%p2213) target = $region68
        $region67: #{tpu_custom_call.1} parent=59 // pred_region
          %s2216 = smul.u32 2, %s30
          %s2218 = ssub.s32 256, 256
          %2219 = vsyncadd %s2209, %s2218
          %s2220 = smul.addr %s29, 2
          %s2221 = sadd.s32 %s2216, %s2220
          %s2222 = smul.addr %s2221, 128
          %s2223 = scalar_lea.hbm %s10, %s2222
          %s2224 = sshll.u32 %s2212, 4
          %s2225 = int_to_ptr.vmem [resolvable:$true] %s2224
          %2230 = dma.vmem_to_hbm [thread:$0]  %s2225, 256, %s2223, %s2209, 128, 128, 8
        $region68: #{tpu_custom_call.1} parent=59 // pred_fallthru
          _
      $region60: #{tpu_custom_call.1} parent=5 // pred_fallthru
        _
      %p2231 = scmp.le.s32.totalorder 2, %s20
      // Predicated region
      $region69: #{tpu_custom_call.1} parent=5 // pred_check
        %p2232 = pneg %p2231
      $region70: #{tpu_custom_call.1} parent=5 // pred_check_branch
        %2234 = sbr.rel (%p2232) target = $region72
      $region71: #{tpu_custom_call.1} parent=5 // pred_region
        %s2235 = ssub.s32 %s20, 2
        // Predicated region
        $region73: #{tpu_custom_call.1} parent=71 // pred_check
          %p2236 = pneg %p297
        $region74: #{tpu_custom_call.1} parent=71 // pred_check_branch
          %2238 = sbr.rel (%p2236) target = $region76
        $region75: #{tpu_custom_call.1} parent=71 // pred_region
          %s2239 = sand.u32 %s282, 1
          %s2240 = scalar_lea.sflag [#allocation3], %s2239
          %s2241 = sand.u32 %s282, 1
          %s2242 = smul.addr %s2241, 16
          %s2243 = scalar_lea.vmem [#allocation5], %s2242
          %2244 = dma.done %s2240, 256
        $region76: #{tpu_custom_call.1} parent=71 // pred_fallthru
          _
      $region72: #{tpu_custom_call.1} parent=5 // pred_fallthru
        _
    $region6: #{tpu_custom_call.1} parent=1 // loop_footer
      %s24 = sadd.s32 1, %s20
    $region7: #{tpu_custom_call.1} parent=1 // loop_footer_branch
      %19 = sbr.rel target = $region3
    $region8: #{tpu_custom_call.1} parent=1 // loop_exit
      _
    %2245 = vsyncpa [#allocation3], 1
    %s2246 = scalar_lea.sflag [#allocation3], 1
    %2247 = vsyncpa %s2246, 1
    %2248 = vsyncpa [#allocation4], 1
    %s2249 = scalar_lea.sflag [#allocation4], 1
    %2250 = vsyncpa %s2249, 1

</llo_original>
